<compile_context>
chip_gen: v7x
topology: tpu7x:2x2x1
jax: 0.10.0
libtpu: 0.0.40
codegen_flags: <defaults>
</compile_context>

<pallas_src>
import jax
import jax.numpy as jnp
from jax import lax
from jax.experimental import pallas as pl
from jax.experimental.pallas import tpu as pltpu


def qg_att_kernel(fs_ref, fm_ref, wq_ref, w3_ref, w4_ref, out_s_ref, out_m_ref):
    TL, C, P = fs_ref.shape
    w3 = w3_ref[...]                                # (C, C)
    w4 = w4_ref[...]                                # (C, C)
    # wq already contains W2@Eq + b2 + b3; duplicate it across both lane halves
    # once per grid step (loop-invariant, hoisted out of the step loop).
    wq = wq_ref[...]                                # (C, P)
    wq2 = jnp.concatenate([wq, wq], axis=-1)        # (C, 2P)

    def softmax_gate(z, x):
        # Softmax over the spatial (lane) axis per channel, then gate the input.
        m = jnp.max(z, axis=-1, keepdims=True)
        e = jnp.exp(z - m)
        s = jnp.sum(e, axis=-1, keepdims=True)
        return (e * pl.reciprocal(s, approx=False)) * x   # divide on the EUP slot

    def step(t, carry):
        xs = fs_ref[t].astype(jnp.float32)          # (C, P)
        xm = fm_ref[t].astype(jnp.float32)          # (C, P)
        # Concat streams on the lane axis: one (C, 2P) RHS doubles MXU N per
        # weight load (the C=K underfill is inherent to the model).
        x = jnp.concatenate([xs, xm], axis=-1)      # (C, 2P)
        inz = jnp.dot(w3, x, preferred_element_type=jnp.float32) + wq2
        # NOTE: W4's per-channel bias is omitted on purpose — softmax over the
        # spatial axis is invariant to a per-channel constant, output unchanged.
        z = jnp.dot(w4, jnp.tanh(inz), preferred_element_type=jnp.float32)
        out_s_ref[t] = softmax_gate(z[:, :P], xs).astype(out_s_ref.dtype)
        out_m_ref[t] = softmax_gate(z[:, P:], xm).astype(out_m_ref.dtype)
        return carry

    lax.fori_loop(0, TL, step, 0, unroll=True)


def question_guided_att(f_s, f_m, eq, w3, b3, w4, b4, w2, b2, *, block_steps=None):
    """f_s, f_m: (B, L, C, H, W); eq: (B, C, H, W); weights (C, C); biases (C,).

    b4 is accepted for API parity with the PyTorch module but mathematically
    cannot affect the output (softmax over spatial is shift-invariant per channel).
    """
    B, L, C, H, W = f_s.shape
    P = H * W
    Ch = w3.shape[0]
    # The module's final gating A * f requires input channels == hidden channels.
    assert Ch == C and w2.shape == (Ch, Ch) and w4.shape == (Ch, Ch)
    assert P % 128 == 0 and C % 8 == 0, "channels on sublanes, H*W on lanes"

    # Free reshapes in the wrapper: spatial goes to the 128-lane axis.
    fs2 = f_s.reshape(B, L, C, P)
    fm2 = f_m.reshape(B, L, C, P)
    eq2 = eq.reshape(B, Ch, P)

    # w_weight = W2(Eq) with b2 and the per-step b3 folded in: tiny per-batch
    # einsum hoisted out of the kernel (removes the scratch/pl.when ordering
    # dependency so both grid axes can be "parallel").
    hp = jax.lax.Precision.HIGHEST
    wq = (jnp.einsum('oc,bcp->bop', w2, eq2, precision=hp)
          + (b2 + b3)[None, :, None]).astype(jnp.float32)

    # Choose TL (video steps per grid iteration): keep each pipelined array's tile
    # <= ~2 MiB so 4 double-buffered arrays stay well inside v7x's 64 MiB VMEM.
    if block_steps is None:
        per_step_bytes = C * P * jnp.dtype(f_s.dtype).itemsize
        tl_max = max(1, (2 * 1024 * 1024) // per_step_bytes)
        TL = 1
        for d in range(1, L + 1):
            if L % d == 0 and d <= tl_max:
                TL = d
    else:
        TL = int(block_steps)
        assert L % TL == 0

    data_spec = pl.BlockSpec((None, TL, C, P), lambda b, i: (b, i, 0, 0))
    out_spec = pl.BlockSpec((None, TL, C, P), lambda b, i: (b, i, 0, 0))
    wq_spec = pl.BlockSpec((None, Ch, P), lambda b, i: (b, 0, 0))
    wmat_spec = pl.BlockSpec((Ch, Ch), lambda b, i: (0, 0))

    out_s, out_m = pl.pallas_call(
        qg_att_kernel,
        out_shape=(
            jax.ShapeDtypeStruct((B, L, C, P), f_s.dtype),
            jax.ShapeDtypeStruct((B, L, C, P), f_m.dtype),
        ),
        grid_spec=pltpu.PrefetchScalarGridSpec(
            num_scalar_prefetch=0,
            grid=(B, L // TL),
            in_specs=[data_spec, data_spec, wq_spec, wmat_spec, wmat_spec],
            out_specs=(out_spec, out_spec),
        ),
        compiler_params=pltpu.CompilerParams(
            dimension_semantics=("parallel", "parallel"),
            vmem_limit_bytes=32 * 1024 * 1024),
    )(fs2, fm2, wq, w3, w4)

    return out_s.reshape(B, L, C, H, W), out_m.reshape(B, L, C, H, W)


def _reference(f_s, f_m, eq, w3, b3, w4, b4, w2, b2):
    """Pure-JAX reference matching the PyTorch module."""
    B, L, C, H, W = f_s.shape
    hp = jax.lax.Precision.HIGHEST

    def conv1x1(x, w, b):  # x: (B, Cin, H, W)
        return jnp.einsum('oc,bchw->bohw', w, x, precision=hp) + b[None, :, None, None]

    wq = conv1x1(eq, w2, b2)

    def one(x):  # (B, C, H, W)
        inz = conv1x1(x, w3, b3) + wq
        z = conv1x1(jnp.tanh(inz), w4, b4)
        a = jax.nn.softmax(z.reshape(B, C, H * W), axis=2).reshape(B, C, H, W)
        return a * x

    a_s = jnp.stack([one(f_s[:, i]) for i in range(L)], axis=1)
    a_m = jnp.stack([one(f_m[:, i]) for i in range(L)], axis=1)
    return a_s, a_m


if __name__ == "__main__":
    # Small shapes consistent with the module: batch=2, seq(len_v)=8,
    # input_size == hidden_size = 32 channels, 16x16 spatial (H*W = 256 lanes).
    B, L, C, H, W = 2, 8, 32, 16, 16

    key = jax.random.PRNGKey(0)
    ks = jax.random.split(key, 9)
    f_s = jax.random.normal(ks[0], (B, L, C, H, W), jnp.float32)
    f_m = jax.random.normal(ks[1], (B, L, C, H, W), jnp.float32)
    eq = jax.random.normal(ks[2], (B, C, H, W), jnp.float32)

    lim = 1.0 / (C ** 0.5)  # PyTorch Conv2d-style uniform init
    w3 = jax.random.uniform(ks[3], (C, C), jnp.float32, -lim, lim)
    b3 = jax.random.uniform(ks[4], (C,), jnp.float32, -lim, lim)
    w4 = jax.random.uniform(ks[5], (C, C), jnp.float32, -lim, lim)
    b4 = jax.random.uniform(ks[6], (C,), jnp.float32, -lim, lim)
    w2 = jax.random.uniform(ks[7], (C, C), jnp.float32, -lim, lim)
    b2 = jax.random.uniform(ks[8], (C,), jnp.float32, -lim, lim)

    # block_steps=4 -> grid=(B, L//4)=(2, 2): exercises the multi-step blocking path.
    out_s, out_m = question_guided_att(f_s, f_m, eq, w3, b3, w4, b4, w2, b2,
                                       block_steps=4)
    out_s = jax.block_until_ready(out_s)
    out_m = jax.block_until_ready(out_m)

    ref_s, ref_m = _reference(f_s, f_m, eq, w3, b3, w4, b4, w2, b2)
    assert out_s.shape == (B, L, C, H, W) and out_m.shape == (B, L, C, H, W)
    assert jnp.allclose(out_s, ref_s, atol=1e-4, rtol=1e-4)
    assert jnp.allclose(out_m, ref_m, atol=1e-4, rtol=1e-4)

    print("KERNEL_OK")
</pallas_src>

<mosaic_0001>
module attributes {stable_mosaic.version = 11 : i64} {
  func.func @qg_att_kernel(%arg0: i32, %arg1: i32, %arg2: memref<1x4x32x256xf32, #tpu.memory_space<vmem>>, %arg3: memref<1x4x32x256xf32, #tpu.memory_space<vmem>>, %arg4: memref<1x32x256xf32, #tpu.memory_space<vmem>>, %arg5: memref<32x32xf32, #tpu.memory_space<vmem>>, %arg6: memref<32x32xf32, #tpu.memory_space<vmem>>, %arg7: memref<1x4x32x256xf32, #tpu.memory_space<vmem>>, %arg8: memref<1x4x32x256xf32, #tpu.memory_space<vmem>>) attributes {dimension_semantics = [#tpu.dimension_semantics<parallel>, #tpu.dimension_semantics<parallel>], iteration_bounds = array<i64: 2, 2>, scalar_prefetch = 0 : i64, scratch_operands = 0 : i64, tpu.core_type = #tpu.core_type<tc>, window_params = [{transform_indices = @transform_0, window_bounds = array<i64: 1, 4, 32, 256>}, {transform_indices = @transform_1, window_bounds = array<i64: 1, 4, 32, 256>}, {transform_indices = @transform_2, window_bounds = array<i64: 1, 32, 256>}, {pipeline_mode = #tpu.pipeline_mode<synchronous>, transform_indices = @transform_3, window_bounds = array<i64: 32, 32>}, {pipeline_mode = #tpu.pipeline_mode<synchronous>, transform_indices = @transform_4, window_bounds = array<i64: 32, 32>}, {transform_indices = @transform_5, window_bounds = array<i64: 1, 4, 32, 256>}, {transform_indices = @transform_6, window_bounds = array<i64: 1, 4, 32, 256>}]} {
    %c0 = arith.constant 0 : index
    %c0_0 = arith.constant 0 : index
    %0 = vector.load %arg5[%c0, %c0_0] : memref<32x32xf32, #tpu.memory_space<vmem>>, vector<32x32xf32>
    %c0_1 = arith.constant 0 : index
    %c0_2 = arith.constant 0 : index
    %1 = vector.load %arg6[%c0_1, %c0_2] : memref<32x32xf32, #tpu.memory_space<vmem>>, vector<32x32xf32>
    %c0_3 = arith.constant 0 : index
    %c0_4 = arith.constant 0 : index
    %c0_5 = arith.constant 0 : index
    %2 = vector.load %arg4[%c0_3, %c0_4, %c0_5] : memref<1x32x256xf32, #tpu.memory_space<vmem>>, vector<1x32x256xf32>
    %3 = vector.shape_cast %2 : vector<1x32x256xf32> to vector<32x256xf32>
    %4 = tpu.concatenate %3, %3 in 1 : vector<32x256xf32>, vector<32x256xf32> -> vector<32x512xf32>
    %c0_i32 = arith.constant 0 : i32
    %c0_6 = arith.constant 0 : index
    %5 = arith.index_cast %c0_i32 : i32 to index
    %c0_7 = arith.constant 0 : index
    %c0_8 = arith.constant 0 : index
    %6 = vector.load %arg2[%c0_6, %5, %c0_7, %c0_8] : memref<1x4x32x256xf32, #tpu.memory_space<vmem>>, vector<1x1x32x256xf32>
    %7 = vector.shape_cast %6 : vector<1x1x32x256xf32> to vector<32x256xf32>
    %c0_9 = arith.constant 0 : index
    %8 = arith.index_cast %c0_i32 : i32 to index
    %c0_10 = arith.constant 0 : index
    %c0_11 = arith.constant 0 : index
    %9 = vector.load %arg3[%c0_9, %8, %c0_10, %c0_11] : memref<1x4x32x256xf32, #tpu.memory_space<vmem>>, vector<1x1x32x256xf32>
    %10 = vector.shape_cast %9 : vector<1x1x32x256xf32> to vector<32x256xf32>
    %11 = tpu.concatenate %7, %10 in 1 : vector<32x256xf32>, vector<32x256xf32> -> vector<32x512xf32>
    %cst = arith.constant dense<0.000000e+00> : vector<32x512xf32>
    %12 = tpu.matmul %0, %11, %cst {dimension_numbers = #tpu.dot_dimension_numbers<[1], [0], [0], [1], [0, 0, 1, 1], [], []>} : vector<32x32xf32>, vector<32x512xf32>, vector<32x512xf32> -> vector<32x512xf32>
    %13 = arith.addf %12, %4 : vector<32x512xf32>
    %14 = math.tanh %13 : vector<32x512xf32>
    %cst_12 = arith.constant dense<0.000000e+00> : vector<32x512xf32>
    %15 = tpu.matmul %1, %14, %cst_12 {dimension_numbers = #tpu.dot_dimension_numbers<[1], [0], [0], [1], [0, 0, 1, 1], [], []>} : vector<32x32xf32>, vector<32x512xf32>, vector<32x512xf32> -> vector<32x512xf32>
    %16 = vector.extract_strided_slice %15 {offsets = [0, 0], sizes = [32, 256], strides = [1, 1]} : vector<32x512xf32> to vector<32x256xf32>
    %cst_13 = arith.constant dense<0xFF800000> : vector<32xf32>
    %17 = vector.multi_reduction <maximumf>, %16, %cst_13 [1] : vector<32x256xf32> to vector<32xf32>
    %18 = vector.shape_cast %17 : vector<32xf32> to vector<32x1xf32>
    %19 = vector.broadcast %18 : vector<32x1xf32> to vector<32x256xf32>
    %20 = arith.subf %16, %19 : vector<32x256xf32>
    %21 = math.exp %20 : vector<32x256xf32>
    %cst_14 = arith.constant dense<0.000000e+00> : vector<32xf32>
    %22 = vector.multi_reduction <add>, %21, %cst_14 [1] : vector<32x256xf32> to vector<32xf32>
    %23 = vector.shape_cast %22 : vector<32xf32> to vector<32x1xf32>
    %24 = tpu.reciprocal %23 : vector<32x1xf32> -> vector<32x1xf32>
    %25 = vector.broadcast %24 : vector<32x1xf32> to vector<32x256xf32>
    %26 = arith.mulf %21, %25 : vector<32x256xf32>
    %27 = arith.mulf %26, %7 : vector<32x256xf32>
    %c0_15 = arith.constant 0 : index
    %28 = arith.index_cast %c0_i32 : i32 to index
    %c0_16 = arith.constant 0 : index
    %c0_17 = arith.constant 0 : index
    %29 = vector.load %arg7[%c0_15, %28, %c0_16, %c0_17] : memref<1x4x32x256xf32, #tpu.memory_space<vmem>>, vector<1x1x32x256xf32>
    %30 = vector.shape_cast %29 : vector<1x1x32x256xf32> to vector<32x256xf32>
    %31 = vector.shape_cast %27 : vector<32x256xf32> to vector<1x1x32x256xf32>
    tpu.vector_store %arg7[%c0_15, %28, %c0_16, %c0_17], %31 {strides = array<i32>} : memref<1x4x32x256xf32, #tpu.memory_space<vmem>>, vector<1x1x32x256xf32>,
    %32 = vector.extract_strided_slice %15 {offsets = [0, 256], sizes = [32, 256], strides = [1, 1]} : vector<32x512xf32> to vector<32x256xf32>
    %cst_18 = arith.constant dense<0xFF800000> : vector<32xf32>
    %33 = vector.multi_reduction <maximumf>, %32, %cst_18 [1] : vector<32x256xf32> to vector<32xf32>
    %34 = vector.shape_cast %33 : vector<32xf32> to vector<32x1xf32>
    %35 = vector.broadcast %34 : vector<32x1xf32> to vector<32x256xf32>
    %36 = arith.subf %32, %35 : vector<32x256xf32>
    %37 = math.exp %36 : vector<32x256xf32>
    %cst_19 = arith.constant dense<0.000000e+00> : vector<32xf32>
    %38 = vector.multi_reduction <add>, %37, %cst_19 [1] : vector<32x256xf32> to vector<32xf32>
    %39 = vector.shape_cast %38 : vector<32xf32> to vector<32x1xf32>
    %40 = tpu.reciprocal %39 : vector<32x1xf32> -> vector<32x1xf32>
    %41 = vector.broadcast %40 : vector<32x1xf32> to vector<32x256xf32>
    %42 = arith.mulf %37, %41 : vector<32x256xf32>
    %43 = arith.mulf %42, %10 : vector<32x256xf32>
    %c0_20 = arith.constant 0 : index
    %44 = arith.index_cast %c0_i32 : i32 to index
    %c0_21 = arith.constant 0 : index
    %c0_22 = arith.constant 0 : index
    %45 = vector.load %arg8[%c0_20, %44, %c0_21, %c0_22] : memref<1x4x32x256xf32, #tpu.memory_space<vmem>>, vector<1x1x32x256xf32>
    %46 = vector.shape_cast %45 : vector<1x1x32x256xf32> to vector<32x256xf32>
    %47 = vector.shape_cast %43 : vector<32x256xf32> to vector<1x1x32x256xf32>
    tpu.vector_store %arg8[%c0_20, %44, %c0_21, %c0_22], %47 {strides = array<i32>} : memref<1x4x32x256xf32, #tpu.memory_space<vmem>>, vector<1x1x32x256xf32>,
    %c1_i32 = arith.constant 1 : i32
    %c0_23 = arith.constant 0 : index
    %48 = arith.index_cast %c1_i32 : i32 to index
    %c0_24 = arith.constant 0 : index
    %c0_25 = arith.constant 0 : index
    %49 = vector.load %arg2[%c0_23, %48, %c0_24, %c0_25] : memref<1x4x32x256xf32, #tpu.memory_space<vmem>>, vector<1x1x32x256xf32>
    %50 = vector.shape_cast %49 : vector<1x1x32x256xf32> to vector<32x256xf32>
    %c0_26 = arith.constant 0 : index
    %51 = arith.index_cast %c1_i32 : i32 to index
    %c0_27 = arith.constant 0 : index
    %c0_28 = arith.constant 0 : index
    %52 = vector.load %arg3[%c0_26, %51, %c0_27, %c0_28] : memref<1x4x32x256xf32, #tpu.memory_space<vmem>>, vector<1x1x32x256xf32>
    %53 = vector.shape_cast %52 : vector<1x1x32x256xf32> to vector<32x256xf32>
    %54 = tpu.concatenate %50, %53 in 1 : vector<32x256xf32>, vector<32x256xf32> -> vector<32x512xf32>
    %cst_29 = arith.constant dense<0.000000e+00> : vector<32x512xf32>
    %55 = tpu.matmul %0, %54, %cst_29 {dimension_numbers = #tpu.dot_dimension_numbers<[1], [0], [0], [1], [0, 0, 1, 1], [], []>} : vector<32x32xf32>, vector<32x512xf32>, vector<32x512xf32> -> vector<32x512xf32>
    %56 = arith.addf %55, %4 : vector<32x512xf32>
    %57 = math.tanh %56 : vector<32x512xf32>
    %cst_30 = arith.constant dense<0.000000e+00> : vector<32x512xf32>
    %58 = tpu.matmul %1, %57, %cst_30 {dimension_numbers = #tpu.dot_dimension_numbers<[1], [0], [0], [1], [0, 0, 1, 1], [], []>} : vector<32x32xf32>, vector<32x512xf32>, vector<32x512xf32> -> vector<32x512xf32>
    %59 = vector.extract_strided_slice %58 {offsets = [0, 0], sizes = [32, 256], strides = [1, 1]} : vector<32x512xf32> to vector<32x256xf32>
    %cst_31 = arith.constant dense<0xFF800000> : vector<32xf32>
    %60 = vector.multi_reduction <maximumf>, %59, %cst_31 [1] : vector<32x256xf32> to vector<32xf32>
    %61 = vector.shape_cast %60 : vector<32xf32> to vector<32x1xf32>
    %62 = vector.broadcast %61 : vector<32x1xf32> to vector<32x256xf32>
    %63 = arith.subf %59, %62 : vector<32x256xf32>
    %64 = math.exp %63 : vector<32x256xf32>
    %cst_32 = arith.constant dense<0.000000e+00> : vector<32xf32>
    %65 = vector.multi_reduction <add>, %64, %cst_32 [1] : vector<32x256xf32> to vector<32xf32>
    %66 = vector.shape_cast %65 : vector<32xf32> to vector<32x1xf32>
    %67 = tpu.reciprocal %66 : vector<32x1xf32> -> vector<32x1xf32>
    %68 = vector.broadcast %67 : vector<32x1xf32> to vector<32x256xf32>
    %69 = arith.mulf %64, %68 : vector<32x256xf32>
    %70 = arith.mulf %69, %50 : vector<32x256xf32>
    %c0_33 = arith.constant 0 : index
    %71 = arith.index_cast %c1_i32 : i32 to index
    %c0_34 = arith.constant 0 : index
    %c0_35 = arith.constant 0 : index
    %72 = vector.load %arg7[%c0_33, %71, %c0_34, %c0_35] : memref<1x4x32x256xf32, #tpu.memory_space<vmem>>, vector<1x1x32x256xf32>
    %73 = vector.shape_cast %72 : vector<1x1x32x256xf32> to vector<32x256xf32>
    %74 = vector.shape_cast %70 : vector<32x256xf32> to vector<1x1x32x256xf32>
    tpu.vector_store %arg7[%c0_33, %71, %c0_34, %c0_35], %74 {strides = array<i32>} : memref<1x4x32x256xf32, #tpu.memory_space<vmem>>, vector<1x1x32x256xf32>,
    %75 = vector.extract_strided_slice %58 {offsets = [0, 256], sizes = [32, 256], strides = [1, 1]} : vector<32x512xf32> to vector<32x256xf32>
    %cst_36 = arith.constant dense<0xFF800000> : vector<32xf32>
    %76 = vector.multi_reduction <maximumf>, %75, %cst_36 [1] : vector<32x256xf32> to vector<32xf32>
    %77 = vector.shape_cast %76 : vector<32xf32> to vector<32x1xf32>
    %78 = vector.broadcast %77 : vector<32x1xf32> to vector<32x256xf32>
    %79 = arith.subf %75, %78 : vector<32x256xf32>
    %80 = math.exp %79 : vector<32x256xf32>
    %cst_37 = arith.constant dense<0.000000e+00> : vector<32xf32>
    %81 = vector.multi_reduction <add>, %80, %cst_37 [1] : vector<32x256xf32> to vector<32xf32>
    %82 = vector.shape_cast %81 : vector<32xf32> to vector<32x1xf32>
    %83 = tpu.reciprocal %82 : vector<32x1xf32> -> vector<32x1xf32>
    %84 = vector.broadcast %83 : vector<32x1xf32> to vector<32x256xf32>
    %85 = arith.mulf %80, %84 : vector<32x256xf32>
    %86 = arith.mulf %85, %53 : vector<32x256xf32>
    %c0_38 = arith.constant 0 : index
    %87 = arith.index_cast %c1_i32 : i32 to index
    %c0_39 = arith.constant 0 : index
    %c0_40 = arith.constant 0 : index
    %88 = vector.load %arg8[%c0_38, %87, %c0_39, %c0_40] : memref<1x4x32x256xf32, #tpu.memory_space<vmem>>, vector<1x1x32x256xf32>
    %89 = vector.shape_cast %88 : vector<1x1x32x256xf32> to vector<32x256xf32>
    %90 = vector.shape_cast %86 : vector<32x256xf32> to vector<1x1x32x256xf32>
    tpu.vector_store %arg8[%c0_38, %87, %c0_39, %c0_40], %90 {strides = array<i32>} : memref<1x4x32x256xf32, #tpu.memory_space<vmem>>, vector<1x1x32x256xf32>,
    %c2_i32 = arith.constant 2 : i32
    %c0_41 = arith.constant 0 : index
    %91 = arith.index_cast %c2_i32 : i32 to index
    %c0_42 = arith.constant 0 : index
    %c0_43 = arith.constant 0 : index
    %92 = vector.load %arg2[%c0_41, %91, %c0_42, %c0_43] : memref<1x4x32x256xf32, #tpu.memory_space<vmem>>, vector<1x1x32x256xf32>
    %93 = vector.shape_cast %92 : vector<1x1x32x256xf32> to vector<32x256xf32>
    %c0_44 = arith.constant 0 : index
    %94 = arith.index_cast %c2_i32 : i32 to index
    %c0_45 = arith.constant 0 : index
    %c0_46 = arith.constant 0 : index
    %95 = vector.load %arg3[%c0_44, %94, %c0_45, %c0_46] : memref<1x4x32x256xf32, #tpu.memory_space<vmem>>, vector<1x1x32x256xf32>
    %96 = vector.shape_cast %95 : vector<1x1x32x256xf32> to vector<32x256xf32>
    %97 = tpu.concatenate %93, %96 in 1 : vector<32x256xf32>, vector<32x256xf32> -> vector<32x512xf32>
    %cst_47 = arith.constant dense<0.000000e+00> : vector<32x512xf32>
    %98 = tpu.matmul %0, %97, %cst_47 {dimension_numbers = #tpu.dot_dimension_numbers<[1], [0], [0], [1], [0, 0, 1, 1], [], []>} : vector<32x32xf32>, vector<32x512xf32>, vector<32x512xf32> -> vector<32x512xf32>
    %99 = arith.addf %98, %4 : vector<32x512xf32>
    %100 = math.tanh %99 : vector<32x512xf32>
    %cst_48 = arith.constant dense<0.000000e+00> : vector<32x512xf32>
    %101 = tpu.matmul %1, %100, %cst_48 {dimension_numbers = #tpu.dot_dimension_numbers<[1], [0], [0], [1], [0, 0, 1, 1], [], []>} : vector<32x32xf32>, vector<32x512xf32>, vector<32x512xf32> -> vector<32x512xf32>
    %102 = vector.extract_strided_slice %101 {offsets = [0, 0], sizes = [32, 256], strides = [1, 1]} : vector<32x512xf32> to vector<32x256xf32>
    %cst_49 = arith.constant dense<0xFF800000> : vector<32xf32>
    %103 = vector.multi_reduction <maximumf>, %102, %cst_49 [1] : vector<32x256xf32> to vector<32xf32>
    %104 = vector.shape_cast %103 : vector<32xf32> to vector<32x1xf32>
    %105 = vector.broadcast %104 : vector<32x1xf32> to vector<32x256xf32>
    %106 = arith.subf %102, %105 : vector<32x256xf32>
    %107 = math.exp %106 : vector<32x256xf32>
    %cst_50 = arith.constant dense<0.000000e+00> : vector<32xf32>
    %108 = vector.multi_reduction <add>, %107, %cst_50 [1] : vector<32x256xf32> to vector<32xf32>
    %109 = vector.shape_cast %108 : vector<32xf32> to vector<32x1xf32>
    %110 = tpu.reciprocal %109 : vector<32x1xf32> -> vector<32x1xf32>
    %111 = vector.broadcast %110 : vector<32x1xf32> to vector<32x256xf32>
    %112 = arith.mulf %107, %111 : vector<32x256xf32>
    %113 = arith.mulf %112, %93 : vector<32x256xf32>
    %c0_51 = arith.constant 0 : index
    %114 = arith.index_cast %c2_i32 : i32 to index
    %c0_52 = arith.constant 0 : index
    %c0_53 = arith.constant 0 : index
    %115 = vector.load %arg7[%c0_51, %114, %c0_52, %c0_53] : memref<1x4x32x256xf32, #tpu.memory_space<vmem>>, vector<1x1x32x256xf32>
    %116 = vector.shape_cast %115 : vector<1x1x32x256xf32> to vector<32x256xf32>
    %117 = vector.shape_cast %113 : vector<32x256xf32> to vector<1x1x32x256xf32>
    tpu.vector_store %arg7[%c0_51, %114, %c0_52, %c0_53], %117 {strides = array<i32>} : memref<1x4x32x256xf32, #tpu.memory_space<vmem>>, vector<1x1x32x256xf32>,
    %118 = vector.extract_strided_slice %101 {offsets = [0, 256], sizes = [32, 256], strides = [1, 1]} : vector<32x512xf32> to vector<32x256xf32>
    %cst_54 = arith.constant dense<0xFF800000> : vector<32xf32>
    %119 = vector.multi_reduction <maximumf>, %118, %cst_54 [1] : vector<32x256xf32> to vector<32xf32>
    %120 = vector.shape_cast %119 : vector<32xf32> to vector<32x1xf32>
    %121 = vector.broadcast %120 : vector<32x1xf32> to vector<32x256xf32>
    %122 = arith.subf %118, %121 : vector<32x256xf32>
    %123 = math.exp %122 : vector<32x256xf32>
    %cst_55 = arith.constant dense<0.000000e+00> : vector<32xf32>
    %124 = vector.multi_reduction <add>, %123, %cst_55 [1] : vector<32x256xf32> to vector<32xf32>
    %125 = vector.shape_cast %124 : vector<32xf32> to vector<32x1xf32>
    %126 = tpu.reciprocal %125 : vector<32x1xf32> -> vector<32x1xf32>
    %127 = vector.broadcast %126 : vector<32x1xf32> to vector<32x256xf32>
    %128 = arith.mulf %123, %127 : vector<32x256xf32>
    %129 = arith.mulf %128, %96 : vector<32x256xf32>
    %c0_56 = arith.constant 0 : index
    %130 = arith.index_cast %c2_i32 : i32 to index
    %c0_57 = arith.constant 0 : index
    %c0_58 = arith.constant 0 : index
    %131 = vector.load %arg8[%c0_56, %130, %c0_57, %c0_58] : memref<1x4x32x256xf32, #tpu.memory_space<vmem>>, vector<1x1x32x256xf32>
    %132 = vector.shape_cast %131 : vector<1x1x32x256xf32> to vector<32x256xf32>
    %133 = vector.shape_cast %129 : vector<32x256xf32> to vector<1x1x32x256xf32>
    tpu.vector_store %arg8[%c0_56, %130, %c0_57, %c0_58], %133 {strides = array<i32>} : memref<1x4x32x256xf32, #tpu.memory_space<vmem>>, vector<1x1x32x256xf32>,
    %c3_i32 = arith.constant 3 : i32
    %c0_59 = arith.constant 0 : index
    %134 = arith.index_cast %c3_i32 : i32 to index
    %c0_60 = arith.constant 0 : index
    %c0_61 = arith.constant 0 : index
    %135 = vector.load %arg2[%c0_59, %134, %c0_60, %c0_61] : memref<1x4x32x256xf32, #tpu.memory_space<vmem>>, vector<1x1x32x256xf32>
    %136 = vector.shape_cast %135 : vector<1x1x32x256xf32> to vector<32x256xf32>
    %c0_62 = arith.constant 0 : index
    %137 = arith.index_cast %c3_i32 : i32 to index
    %c0_63 = arith.constant 0 : index
    %c0_64 = arith.constant 0 : index
    %138 = vector.load %arg3[%c0_62, %137, %c0_63, %c0_64] : memref<1x4x32x256xf32, #tpu.memory_space<vmem>>, vector<1x1x32x256xf32>
    %139 = vector.shape_cast %138 : vector<1x1x32x256xf32> to vector<32x256xf32>
    %140 = tpu.concatenate %136, %139 in 1 : vector<32x256xf32>, vector<32x256xf32> -> vector<32x512xf32>
    %cst_65 = arith.constant dense<0.000000e+00> : vector<32x512xf32>
    %141 = tpu.matmul %0, %140, %cst_65 {dimension_numbers = #tpu.dot_dimension_numbers<[1], [0], [0], [1], [0, 0, 1, 1], [], []>} : vector<32x32xf32>, vector<32x512xf32>, vector<32x512xf32> -> vector<32x512xf32>
    %142 = arith.addf %141, %4 : vector<32x512xf32>
    %143 = math.tanh %142 : vector<32x512xf32>
    %cst_66 = arith.constant dense<0.000000e+00> : vector<32x512xf32>
    %144 = tpu.matmul %1, %143, %cst_66 {dimension_numbers = #tpu.dot_dimension_numbers<[1], [0], [0], [1], [0, 0, 1, 1], [], []>} : vector<32x32xf32>, vector<32x512xf32>, vector<32x512xf32> -> vector<32x512xf32>
    %145 = vector.extract_strided_slice %144 {offsets = [0, 0], sizes = [32, 256], strides = [1, 1]} : vector<32x512xf32> to vector<32x256xf32>
    %cst_67 = arith.constant dense<0xFF800000> : vector<32xf32>
    %146 = vector.multi_reduction <maximumf>, %145, %cst_67 [1] : vector<32x256xf32> to vector<32xf32>
    %147 = vector.shape_cast %146 : vector<32xf32> to vector<32x1xf32>
    %148 = vector.broadcast %147 : vector<32x1xf32> to vector<32x256xf32>
    %149 = arith.subf %145, %148 : vector<32x256xf32>
    %150 = math.exp %149 : vector<32x256xf32>
    %cst_68 = arith.constant dense<0.000000e+00> : vector<32xf32>
    %151 = vector.multi_reduction <add>, %150, %cst_68 [1] : vector<32x256xf32> to vector<32xf32>
    %152 = vector.shape_cast %151 : vector<32xf32> to vector<32x1xf32>
    %153 = tpu.reciprocal %152 : vector<32x1xf32> -> vector<32x1xf32>
    %154 = vector.broadcast %153 : vector<32x1xf32> to vector<32x256xf32>
    %155 = arith.mulf %150, %154 : vector<32x256xf32>
    %156 = arith.mulf %155, %136 : vector<32x256xf32>
    %c0_69 = arith.constant 0 : index
    %157 = arith.index_cast %c3_i32 : i32 to index
    %c0_70 = arith.constant 0 : index
    %c0_71 = arith.constant 0 : index
    %158 = vector.load %arg7[%c0_69, %157, %c0_70, %c0_71] : memref<1x4x32x256xf32, #tpu.memory_space<vmem>>, vector<1x1x32x256xf32>
    %159 = vector.shape_cast %158 : vector<1x1x32x256xf32> to vector<32x256xf32>
    %160 = vector.shape_cast %156 : vector<32x256xf32> to vector<1x1x32x256xf32>
    tpu.vector_store %arg7[%c0_69, %157, %c0_70, %c0_71], %160 {strides = array<i32>} : memref<1x4x32x256xf32, #tpu.memory_space<vmem>>, vector<1x1x32x256xf32>,
    %161 = vector.extract_strided_slice %144 {offsets = [0, 256], sizes = [32, 256], strides = [1, 1]} : vector<32x512xf32> to vector<32x256xf32>
    %cst_72 = arith.constant dense<0xFF800000> : vector<32xf32>
    %162 = vector.multi_reduction <maximumf>, %161, %cst_72 [1] : vector<32x256xf32> to vector<32xf32>
    %163 = vector.shape_cast %162 : vector<32xf32> to vector<32x1xf32>
    %164 = vector.broadcast %163 : vector<32x1xf32> to vector<32x256xf32>
    %165 = arith.subf %161, %164 : vector<32x256xf32>
    %166 = math.exp %165 : vector<32x256xf32>
    %cst_73 = arith.constant dense<0.000000e+00> : vector<32xf32>
    %167 = vector.multi_reduction <add>, %166, %cst_73 [1] : vector<32x256xf32> to vector<32xf32>
    %168 = vector.shape_cast %167 : vector<32xf32> to vector<32x1xf32>
    %169 = tpu.reciprocal %168 : vector<32x1xf32> -> vector<32x1xf32>
    %170 = vector.broadcast %169 : vector<32x1xf32> to vector<32x256xf32>
    %171 = arith.mulf %166, %170 : vector<32x256xf32>
    %172 = arith.mulf %171, %139 : vector<32x256xf32>
    %c0_74 = arith.constant 0 : index
    %173 = arith.index_cast %c3_i32 : i32 to index
    %c0_75 = arith.constant 0 : index
    %c0_76 = arith.constant 0 : index
    %174 = vector.load %arg8[%c0_74, %173, %c0_75, %c0_76] : memref<1x4x32x256xf32, #tpu.memory_space<vmem>>, vector<1x1x32x256xf32>
    %175 = vector.shape_cast %174 : vector<1x1x32x256xf32> to vector<32x256xf32>
    %176 = vector.shape_cast %172 : vector<32x256xf32> to vector<1x1x32x256xf32>
    tpu.vector_store %arg8[%c0_74, %173, %c0_75, %c0_76], %176 {strides = array<i32>} : memref<1x4x32x256xf32, #tpu.memory_space<vmem>>, vector<1x1x32x256xf32>,
    %c4_i32 = arith.constant 4 : i32
    return
  }
  func.func @transform_0(%arg0: i32, %arg1: i32) -> (i32, i32, i32, i32) {
    %c0_i32 = arith.constant 0 : i32
    %c0_i32_0 = arith.constant 0 : i32
    %c0_i32_1 = arith.constant 0 : i32
    return %arg0, %arg1, %c0_i32, %c0_i32_0 : i32, i32, i32, i32
  }
  func.func @transform_1(%arg0: i32, %arg1: i32) -> (i32, i32, i32, i32) {
    %c0_i32 = arith.constant 0 : i32
    %c0_i32_0 = arith.constant 0 : i32
    %c0_i32_1 = arith.constant 0 : i32
    return %arg0, %arg1, %c0_i32, %c0_i32_0 : i32, i32, i32, i32
  }
  func.func @transform_2(%arg0: i32, %arg1: i32) -> (i32, i32, i32) {
    %c0_i32 = arith.constant 0 : i32
    %c0_i32_0 = arith.constant 0 : i32
    %c0_i32_1 = arith.constant 0 : i32
    return %arg0, %c0_i32, %c0_i32_0 : i32, i32, i32
  }
  func.func @transform_3(%arg0: i32, %arg1: i32) -> (i32, i32) {
    %c0_i32 = arith.constant 0 : i32
    %c0_i32_0 = arith.constant 0 : i32
    %c0_i32_1 = arith.constant 0 : i32
    return %c0_i32, %c0_i32_0 : i32, i32
  }
  func.func @transform_4(%arg0: i32, %arg1: i32) -> (i32, i32) {
    %c0_i32 = arith.constant 0 : i32
    %c0_i32_0 = arith.constant 0 : i32
    %c0_i32_1 = arith.constant 0 : i32
    return %c0_i32, %c0_i32_0 : i32, i32
  }
  func.func @transform_5(%arg0: i32, %arg1: i32) -> (i32, i32, i32, i32) {
    %c0_i32 = arith.constant 0 : i32
    %c0_i32_0 = arith.constant 0 : i32
    %c0_i32_1 = arith.constant 0 : i32
    return %arg0, %arg1, %c0_i32, %c0_i32_0 : i32, i32, i32, i32
  }
  func.func @transform_6(%arg0: i32, %arg1: i32) -> (i32, i32, i32, i32) {
    %c0_i32 = arith.constant 0 : i32
    %c0_i32_0 = arith.constant 0 : i32
    %c0_i32_1 = arith.constant 0 : i32
    return %arg0, %arg1, %c0_i32, %c0_i32_0 : i32, i32, i32, i32
  }
}

</mosaic_0001>

<llo_original>
// kernel: tpu_custom_call.1
$region0: #{tpu_custom_call.1}
  #allocation0 [shape = 'u32[]', space=smem, size = 0x4, offset = 0x4, fixed_abs, tag = 'smem constant byte address 0x4 - core index']
  #allocation1 [shape = 'u32[144,128]{1,0:T(1,128)}', space=vmem, size = 0x12000, scoped, tag = 'internal scratch']
  %s0 = inlined_call_operand.hbm [shape: f32[2,8,32,256], index: 0, kind: input, shape index: {}]
  %s1 = inlined_call_operand.hbm [shape: f32[2,8,32,256], index: 1, kind: input, shape index: {}]
  %s2 = inlined_call_operand.hbm [shape: f32[2,32,256], index: 2, kind: input, shape index: {}]
  %s3 = inlined_call_operand.hbm [shape: f32[32,32], index: 3, kind: input, shape index: {}]
  %s4 = inlined_call_operand.hbm [shape: f32[32,32], index: 4, kind: input, shape index: {}]
  %s5 = inlined_call_operand.hbm [shape: f32[2,8,32,256], index: 5, kind: output, shape index: {0}]
  %s6 = inlined_call_operand.hbm [shape: f32[2,8,32,256], index: 6, kind: output, shape index: {1}]
  %7 = xla_tuple %s5, %s6
  %s8 = sld [smem:[#allocation0]]
  $region81: #{tpu_custom_call.1} parent=0
    _
  %s10 = ssub.s32 1, %s8
  %s11 = scalar_select 0, %s10, %s8
  $region1: #{tpu_custom_call.1} parent=0
    #allocation2 [shape = 'u8[262144]{0}', space=vmem, size = 0x40000, scoped, tag = 'input window, operand 0']
    #allocation3 [shape = 's32[2]{0}', space=sflag, size = 0x8, scoped, tag = 'scoped memory for tpu_custom_call.1']
    #allocation4 [shape = 's32[2]{0}', space=sflag, size = 0x8, scoped, tag = 'scoped memory for tpu_custom_call.1']
    #allocation5 [shape = 'u8[262144]{0}', space=vmem, size = 0x40000, scoped, tag = 'input window, operand 1']
    #allocation6 [shape = 's32[2]{0}', space=sflag, size = 0x8, scoped, tag = 'scoped memory for tpu_custom_call.1']
    #allocation7 [shape = 'u8[65536]{0}', space=vmem, size = 0x10000, scoped, tag = 'input window, operand 2']
    #allocation8 [shape = 'u8[16384]{0}', space=vmem, size = 0x4000, scoped, tag = 'input window, operand 3, single buffered']
    #allocation9 [shape = 's32[1]{0}', space=sflag, size = 0x4, scoped, tag = 'scoped memory for tpu_custom_call.1']
    #allocation10 [shape = 'u8[16384]{0}', space=vmem, size = 0x4000, scoped, tag = 'input window, operand 4, single buffered']
    #allocation11 [shape = 'u8[262144]{0}', space=vmem, size = 0x40000, scoped, tag = 'output window, operand 0']
    #allocation12 [shape = 'u8[262144]{0}', space=vmem, size = 0x40000, scoped, tag = 'output window, operand 1']
    #allocation13 [shape = 's32[2]{0}', space=sflag, size = 0x8, scoped, tag = 'scoped memory for tpu_custom_call.1']
    %12 = vsyncpa [#allocation3], 0
    %s13 = scalar_lea.sflag [#allocation3], 1
    %14 = vsyncpa %s13, 0
    %15 = vsyncpa [#allocation6], 0
    %s16 = scalar_lea.sflag [#allocation6], 1
    %17 = vsyncpa %s16, 0
    %18 = vsyncpa [#allocation9], 0
    %19 = vsyncpa [#allocation4], 0
    %s20 = scalar_lea.sflag [#allocation4], 1
    %21 = vsyncpa %s20, 0
    %22 = vsyncpa [#allocation13], 0
    %s23 = scalar_lea.sflag [#allocation13], 1
    %24 = vsyncpa %s23, 0
    loop: start=0, step=1, limit=6
    $region2: #{tpu_custom_call.1} parent=1 // loop_pre_header
      _
    $region3: #{tpu_custom_call.1} parent=1 // loop_header
      %s26 = sphi 0, %s30
      %p27 = scmp.ge.s32.totalorder %s26, 6
      %s33 = sphi 0, %s45
      %s34 = sphi 0, %s41
      %s35 = sphi 0, %s33
      %s36 = sphi 0, %s34
      %s37 = sphi 0, %s35
      %s38 = sphi 0, %s36
      %s50 = sphi 0, %s52
      %s53 = sphi 0, %s50
      %s54 = sphi 0, %s53
      %s70 = sphi 0, %s54
      %s78 = sphi 0, %s80
      %s81 = sphi 0, %s78
      %s82 = sphi 0, %s81
      %s98 = sphi 0, %s82
      %s104 = sphi 0, %s106
      %s107 = sphi 0, %s104
      %s108 = sphi 0, %s107
      %s124 = sphi 0, %s108
      %s128 = sphi 0, %s128
      %s130 = sphi 0, %s128
      %s131 = sphi 0, %s130
      %s145 = sphi 0, %s131
      %s149 = sphi 0, %s149
      %s151 = sphi 0, %s149
      %s152 = sphi 0, %s151
      %s166 = sphi 0, %s152
      %s174 = sphi 0, %s176
      %s177 = sphi 0, %s174
      %s178 = sphi 0, %s177
      %s194 = sphi 0, %s178
      %s202 = sphi 0, %s204
      %s205 = sphi 0, %s202
      %s206 = sphi 0, %s205
      %s222 = sphi 0, %s206
    $region4: #{tpu_custom_call.1} parent=1 // loop_header_branch
      %29 = sbr.rel (%p27) target = $region8
    $region5: #{tpu_custom_call.1} parent=1 // loop_body
      %s31 = ssub.s32 %s26, 1
      %s32 = ssub.s32 %s26, 2
      %s39 = sadd.s32 1, %s34
      %p40 = scmp.ge.s32.totalorder %s39, 2
      %s41 = scalar_select %p40, 0, %s39
      %s42 = sadd.s32 1, %s33
      %s43 = scalar_select %p40, %s42, %s33
      %p44 = scmp.ge.s32.totalorder %s43, 2
      %s45 = scalar_select %p44, 0, %s43
      %s46 = ssub.s32 %s33, %s45
      %s47 = ssub.s32 %s34, %s41
      %s48 = sor.u32 %s46, %s47
      %p49 = scmp.eq.s32.totalorder %s48, 0
      %s51 = sadd.s32 %s50, 1
      %s52 = scalar_select %p49, %s50, %s51
      %p55 = pneg %p49
      %p56 = scmp.eq.s32.totalorder %s26, 3
      %p57 = por %p55, %p56
      %p58 = scmp.ne.s32.totalorder %s50, %s53
      %p59 = scmp.eq.s32.totalorder %s26, 0
      %p60 = por %p58, %p59
      %p61 = scmp.ne.s32.totalorder %s50, %s53
      %p62 = scmp.eq.s32.totalorder %s31, 3
      %p63 = por %p61, %p62
      %p64 = scmp.ne.s32.totalorder %s53, %s54
      %p65 = scmp.eq.s32.totalorder %s31, 0
      %p66 = por %p64, %p65
      %p67 = scmp.ne.s32.totalorder %s53, %s54
      %p68 = scmp.eq.s32.totalorder %s32, 3
      %p69 = por %p67, %p68
      %p71 = scmp.ne.s32.totalorder %s54, %s70
      %p72 = scmp.eq.s32.totalorder %s32, 0
      %p73 = por %p71, %p72
      %s74 = ssub.s32 %s33, %s45
      %s75 = ssub.s32 %s34, %s41
      %s76 = sor.u32 %s74, %s75
      %p77 = scmp.eq.s32.totalorder %s76, 0
      %s79 = sadd.s32 %s78, 1
      %s80 = scalar_select %p77, %s78, %s79
      %p83 = pneg %p77
      %p84 = scmp.eq.s32.totalorder %s26, 3
      %p85 = por %p83, %p84
      %p86 = scmp.ne.s32.totalorder %s78, %s81
      %p87 = scmp.eq.s32.totalorder %s26, 0
      %p88 = por %p86, %p87
      %p89 = scmp.ne.s32.totalorder %s78, %s81
      %p90 = scmp.eq.s32.totalorder %s31, 3
      %p91 = por %p89, %p90
      %p92 = scmp.ne.s32.totalorder %s81, %s82
      %p93 = scmp.eq.s32.totalorder %s31, 0
      %p94 = por %p92, %p93
      %p95 = scmp.ne.s32.totalorder %s81, %s82
      %p96 = scmp.eq.s32.totalorder %s32, 3
      %p97 = por %p95, %p96
      %p99 = scmp.ne.s32.totalorder %s82, %s98
      %p100 = scmp.eq.s32.totalorder %s32, 0
      %p101 = por %p99, %p100
      %s102 = ssub.s32 %s33, %s45
      %p103 = scmp.eq.s32.totalorder %s102, 0
      %s105 = sadd.s32 %s104, 1
      %s106 = scalar_select %p103, %s104, %s105
      %p109 = pneg %p103
      %p110 = scmp.eq.s32.totalorder %s26, 3
      %p111 = por %p109, %p110
      %p112 = scmp.ne.s32.totalorder %s104, %s107
      %p113 = scmp.eq.s32.totalorder %s26, 0
      %p114 = por %p112, %p113
      %p115 = scmp.ne.s32.totalorder %s104, %s107
      %p116 = scmp.eq.s32.totalorder %s31, 3
      %p117 = por %p115, %p116
      %p118 = scmp.ne.s32.totalorder %s107, %s108
      %p119 = scmp.eq.s32.totalorder %s31, 0
      %p120 = por %p118, %p119
      %p121 = scmp.ne.s32.totalorder %s107, %s108
      %p122 = scmp.eq.s32.totalorder %s32, 3
      %p123 = por %p121, %p122
      %p125 = scmp.ne.s32.totalorder %s108, %s124
      %p126 = scmp.eq.s32.totalorder %s32, 0
      %p127 = por %p125, %p126
      %s129 = sadd.s32 %s128, 1
      %p132 = scmp.eq.s32.totalorder %s26, 3
      %p133 = scmp.ne.s32.totalorder %s128, %s130
      %p134 = scmp.eq.s32.totalorder %s26, 0
      %p135 = por %p133, %p134
      %p136 = scmp.ne.s32.totalorder %s128, %s130
      %p137 = scmp.eq.s32.totalorder %s31, 3
      %p138 = por %p136, %p137
      %p139 = scmp.ne.s32.totalorder %s130, %s131
      %p140 = scmp.eq.s32.totalorder %s31, 0
      %p141 = por %p139, %p140
      %p142 = scmp.ne.s32.totalorder %s130, %s131
      %p143 = scmp.eq.s32.totalorder %s32, 3
      %p144 = por %p142, %p143
      %p146 = scmp.ne.s32.totalorder %s131, %s145
      %p147 = scmp.eq.s32.totalorder %s32, 0
      %p148 = por %p146, %p147
      %s150 = sadd.s32 %s149, 1
      %p153 = scmp.eq.s32.totalorder %s26, 3
      %p154 = scmp.ne.s32.totalorder %s149, %s151
      %p155 = scmp.eq.s32.totalorder %s26, 0
      %p156 = por %p154, %p155
      %p157 = scmp.ne.s32.totalorder %s149, %s151
      %p158 = scmp.eq.s32.totalorder %s31, 3
      %p159 = por %p157, %p158
      %p160 = scmp.ne.s32.totalorder %s151, %s152
      %p161 = scmp.eq.s32.totalorder %s31, 0
      %p162 = por %p160, %p161
      %p163 = scmp.ne.s32.totalorder %s151, %s152
      %p164 = scmp.eq.s32.totalorder %s32, 3
      %p165 = por %p163, %p164
      %p167 = scmp.ne.s32.totalorder %s152, %s166
      %p168 = scmp.eq.s32.totalorder %s32, 0
      %p169 = por %p167, %p168
      %s170 = ssub.s32 %s33, %s45
      %s171 = ssub.s32 %s34, %s41
      %s172 = sor.u32 %s170, %s171
      %p173 = scmp.eq.s32.totalorder %s172, 0
      %s175 = sadd.s32 %s174, 1
      %s176 = scalar_select %p173, %s174, %s175
      %p179 = pneg %p173
      %p180 = scmp.eq.s32.totalorder %s26, 3
      %p181 = por %p179, %p180
      %p182 = scmp.ne.s32.totalorder %s174, %s177
      %p183 = scmp.eq.s32.totalorder %s26, 0
      %p184 = por %p182, %p183
      %p185 = scmp.ne.s32.totalorder %s174, %s177
      %p186 = scmp.eq.s32.totalorder %s31, 3
      %p187 = por %p185, %p186
      %p188 = scmp.ne.s32.totalorder %s177, %s178
      %p189 = scmp.eq.s32.totalorder %s31, 0
      %p190 = por %p188, %p189
      %p191 = scmp.ne.s32.totalorder %s177, %s178
      %p192 = scmp.eq.s32.totalorder %s32, 3
      %p193 = por %p191, %p192
      %p195 = scmp.ne.s32.totalorder %s178, %s194
      %p196 = scmp.eq.s32.totalorder %s32, 0
      %p197 = por %p195, %p196
      %s198 = ssub.s32 %s33, %s45
      %s199 = ssub.s32 %s34, %s41
      %s200 = sor.u32 %s198, %s199
      %p201 = scmp.eq.s32.totalorder %s200, 0
      %s203 = sadd.s32 %s202, 1
      %s204 = scalar_select %p201, %s202, %s203
      %p207 = pneg %p201
      %p208 = scmp.eq.s32.totalorder %s26, 3
      %p209 = por %p207, %p208
      %p210 = scmp.ne.s32.totalorder %s202, %s205
      %p211 = scmp.eq.s32.totalorder %s26, 0
      %p212 = por %p210, %p211
      %p213 = scmp.ne.s32.totalorder %s202, %s205
      %p214 = scmp.eq.s32.totalorder %s31, 3
      %p215 = por %p213, %p214
      %p216 = scmp.ne.s32.totalorder %s205, %s206
      %p217 = scmp.eq.s32.totalorder %s31, 0
      %p218 = por %p216, %p217
      %p219 = scmp.ne.s32.totalorder %s205, %s206
      %p220 = scmp.eq.s32.totalorder %s32, 3
      %p221 = por %p219, %p220
      %p223 = scmp.ne.s32.totalorder %s206, %s222
      %p224 = scmp.eq.s32.totalorder %s32, 0
      %p225 = por %p223, %p224
      %p226 = scmp.le.s32.totalorder 1, %s26
      %p227 = scmp.lt.s32.totalorder %s26, 5
      %p228 = pnand %p226, %p227
      %p229 = pneg %p228
      // Predicated region
      $region9: #{tpu_custom_call.1} parent=5 // pred_check
        _
      $region10: #{tpu_custom_call.1} parent=5 // pred_check_branch
        %231 = sbr.rel (%p228) target = $region12
      $region11: #{tpu_custom_call.1} parent=5 // pred_region
        %s232 = ssub.s32 %s26, 1
        // Predicated region
        $region13: #{tpu_custom_call.1} parent=11 // pred_check
          %p233 = pneg %p141
        $region14: #{tpu_custom_call.1} parent=11 // pred_check_branch
          %235 = sbr.rel (%p233) target = $region16
        $region15: #{tpu_custom_call.1} parent=11 // pred_region
          %s237 = ssub.s32 512, 512
          %238 = vsyncadd [#allocation9], %s237
          %s239 = sshll.u32 [#allocation8], 4
          %s240 = int_to_ptr.vmem [resolvable:$true] %s239
          %245 = dma.hbm_to_vmem [thread:$0]  %s3, 512, %s240, [#allocation9], 128, 128, 8
        $region16: #{tpu_custom_call.1} parent=11 // pred_fallthru
          _
        // Predicated region
        $region17: #{tpu_custom_call.1} parent=11 // pred_check
          %p246 = pneg %p162
        $region18: #{tpu_custom_call.1} parent=11 // pred_check_branch
          %248 = sbr.rel (%p246) target = $region20
        $region19: #{tpu_custom_call.1} parent=11 // pred_region
          %s250 = ssub.s32 512, 512
          %251 = vsyncadd [#allocation9], %s250
          %s252 = sshll.u32 [#allocation10], 4
          %s253 = int_to_ptr.vmem [resolvable:$true] %s252
          %258 = dma.hbm_to_vmem [thread:$0]  %s4, 512, %s253, [#allocation9], 128, 128, 8
        $region20: #{tpu_custom_call.1} parent=11 // pred_fallthru
          _
      $region12: #{tpu_custom_call.1} parent=5 // pred_fallthru
        _
      %p259 = scmp.lt.s32.totalorder %s26, 4
      // Predicated region
      $region21: #{tpu_custom_call.1} parent=5 // pred_check
        %p260 = pneg %p259
      $region22: #{tpu_custom_call.1} parent=5 // pred_check_branch
        %262 = sbr.rel (%p260) target = $region24
      $region23: #{tpu_custom_call.1} parent=5 // pred_region
        // Predicated region
        $region25: #{tpu_custom_call.1} parent=23 // pred_check
          %p263 = pneg %p60
        $region26: #{tpu_custom_call.1} parent=23 // pred_check_branch
          %265 = sbr.rel (%p263) target = $region28
        $region27: #{tpu_custom_call.1} parent=23 // pred_region
          %s266 = sand.u32 %s50, 1
          %s267 = scalar_lea.sflag [#allocation3], %s266
          %s268 = sand.u32 %s50, 1
          %s269 = smul.addr %s268, 256
          %s270 = scalar_lea.vmem [#allocation2], %s269
          %s271 = smul.u32 4, %s34
          %s273 = ssub.s32 4096, 4096
          %274 = vsyncadd %s267, %s273
          %s275 = smul.addr %s271, 8
          %s276 = smul.addr %s33, 64
          %s277 = sadd.s32 %s275, %s276
          %s278 = smul.addr %s277, 128
          %s279 = scalar_lea.hbm %s0, %s278
          %s280 = sshll.u32 %s270, 4
          %s281 = int_to_ptr.vmem [resolvable:$true] %s280
          %286 = dma.hbm_to_vmem [thread:$0]  %s279, 4096, %s281, %s267, 256, 256, 16
        $region28: #{tpu_custom_call.1} parent=23 // pred_fallthru
          _
        // Predicated region
        $region29: #{tpu_custom_call.1} parent=23 // pred_check
          %p287 = pneg %p88
        $region30: #{tpu_custom_call.1} parent=23 // pred_check_branch
          %289 = sbr.rel (%p287) target = $region32
        $region31: #{tpu_custom_call.1} parent=23 // pred_region
          %s290 = sand.u32 %s26, 1
          %s291 = scalar_lea.sflag [#allocation6], %s290
          %s292 = sand.u32 %s78, 1
          %s293 = smul.addr %s292, 256
          %s294 = scalar_lea.vmem [#allocation5], %s293
          %s295 = smul.u32 4, %s34
          %s297 = ssub.s32 4096, 4096
          %298 = vsyncadd %s291, %s297
          %s299 = smul.addr %s295, 8
          %s300 = smul.addr %s33, 64
          %s301 = sadd.s32 %s299, %s300
          %s302 = smul.addr %s301, 128
          %s303 = scalar_lea.hbm %s1, %s302
          %s304 = sshll.u32 %s294, 4
          %s305 = int_to_ptr.vmem [resolvable:$true] %s304
          %310 = dma.hbm_to_vmem [thread:$0]  %s303, 4096, %s305, %s291, 256, 256, 16
        $region32: #{tpu_custom_call.1} parent=23 // pred_fallthru
          _
        // Predicated region
        $region33: #{tpu_custom_call.1} parent=23 // pred_check
          %p311 = pneg %p114
        $region34: #{tpu_custom_call.1} parent=23 // pred_check_branch
          %313 = sbr.rel (%p311) target = $region36
        $region35: #{tpu_custom_call.1} parent=23 // pred_region
          %s314 = sand.u32 %s26, 1
          %s315 = scalar_lea.sflag [#allocation6], %s314
          %s316 = sand.u32 %s104, 1
          %s317 = smul.addr %s316, 64
          %s318 = scalar_lea.vmem [#allocation7], %s317
          %s320 = ssub.s32 1024, 1024
          %321 = vsyncadd %s315, %s320
          %s322 = smul.addr %s33, 8
          %s323 = smul.addr %s322, 128
          %s324 = scalar_lea.hbm %s2, %s323
          %s325 = sshll.u32 %s318, 4
          %s326 = int_to_ptr.vmem [resolvable:$true] %s325
          %331 = dma.hbm_to_vmem [thread:$0]  %s324, 1024, %s326, %s315, 256, 256, 16
        $region36: #{tpu_custom_call.1} parent=23 // pred_fallthru
          _
      $region24: #{tpu_custom_call.1} parent=5 // pred_fallthru
        _
      %p332 = scmp.le.s32.totalorder 1, %s26
      %p333 = scmp.lt.s32.totalorder %s26, 5
      %p334 = pnand %p332, %p333
      %p335 = pneg %p334
      // Predicated region
      $region37: #{tpu_custom_call.1} parent=5 // pred_check
        _
      $region38: #{tpu_custom_call.1} parent=5 // pred_check_branch
        %337 = sbr.rel (%p334) target = $region40
      $region39: #{tpu_custom_call.1} parent=5 // pred_region
        %s338 = ssub.s32 %s26, 1
        %s339 = sand.u32 %s53, 1
        %s340 = scalar_lea.sflag [#allocation3], %s339
        %s341 = sand.u32 %s53, 1
        %s342 = smul.addr %s341, 256
        %s343 = scalar_lea.vmem [#allocation2], %s342
        // Predicated region
        $region41: #{tpu_custom_call.1} parent=39 // pred_check
          %p344 = pneg %p66
        $region42: #{tpu_custom_call.1} parent=39 // pred_check_branch
          %346 = sbr.rel (%p344) target = $region44
        $region43: #{tpu_custom_call.1} parent=39 // pred_region
          %347 = dma.done %s340, 4096
        $region44: #{tpu_custom_call.1} parent=39 // pred_fallthru
          _
        %s348 = sand.u32 %s31, 1
        %s349 = scalar_lea.sflag [#allocation6], %s348
        %s350 = sand.u32 %s81, 1
        %s351 = smul.addr %s350, 256
        %s352 = scalar_lea.vmem [#allocation5], %s351
        // Predicated region
        $region45: #{tpu_custom_call.1} parent=39 // pred_check
          %p353 = pneg %p94
        $region46: #{tpu_custom_call.1} parent=39 // pred_check_branch
          %355 = sbr.rel (%p353) target = $region48
        $region47: #{tpu_custom_call.1} parent=39 // pred_region
          %356 = dma.done %s349, 4096
        $region48: #{tpu_custom_call.1} parent=39 // pred_fallthru
          _
        %s357 = sand.u32 %s31, 1
        %s358 = scalar_lea.sflag [#allocation6], %s357
        %s359 = sand.u32 %s107, 1
        %s360 = smul.addr %s359, 64
        %s361 = scalar_lea.vmem [#allocation7], %s360
        // Predicated region
        $region49: #{tpu_custom_call.1} parent=39 // pred_check
          %p362 = pneg %p120
        $region50: #{tpu_custom_call.1} parent=39 // pred_check_branch
          %364 = sbr.rel (%p362) target = $region52
        $region51: #{tpu_custom_call.1} parent=39 // pred_region
          %365 = dma.done %s358, 1024
        $region52: #{tpu_custom_call.1} parent=39 // pred_fallthru
          _
        // Predicated region
        $region53: #{tpu_custom_call.1} parent=39 // pred_check
          %p366 = pneg %p141
        $region54: #{tpu_custom_call.1} parent=39 // pred_check_branch
          %368 = sbr.rel (%p366) target = $region56
        $region55: #{tpu_custom_call.1} parent=39 // pred_region
          %369 = dma.done [#allocation9], 512
        $region56: #{tpu_custom_call.1} parent=39 // pred_fallthru
          _
        // Predicated region
        $region57: #{tpu_custom_call.1} parent=39 // pred_check
          %p370 = pneg %p162
        $region58: #{tpu_custom_call.1} parent=39 // pred_check_branch
          %372 = sbr.rel (%p370) target = $region60
        $region59: #{tpu_custom_call.1} parent=39 // pred_region
          %373 = dma.done [#allocation9], 512
        $region60: #{tpu_custom_call.1} parent=39 // pred_fallthru
          _
        %s374 = sand.u32 %s53, 1
        %s375 = scalar_lea.sflag [#allocation3], %s374
        %s376 = sand.u32 %s53, 1
        %s377 = smul.addr %s376, 256
        %s378 = scalar_lea.vmem [#allocation2], %s377
        %p379 = pneg %p66
        %p380 = pneg %p63
        %s381 = sand.u32 %s31, 1
        %s382 = scalar_lea.sflag [#allocation6], %s381
        %s383 = sand.u32 %s81, 1
        %s384 = smul.addr %s383, 256
        %s385 = scalar_lea.vmem [#allocation5], %s384
        %p386 = pneg %p94
        %p387 = pneg %p91
        %s388 = sand.u32 %s31, 1
        %s389 = scalar_lea.sflag [#allocation6], %s388
        %s390 = sand.u32 %s107, 1
        %s391 = smul.addr %s390, 64
        %s392 = scalar_lea.vmem [#allocation7], %s391
        %p393 = pneg %p120
        %p394 = pneg %p117
        %p395 = pneg %p141
        %p396 = pneg %p138
        %p397 = pneg %p162
        %p398 = pneg %p159
        %p399 = pneg %p190
        %p400 = pneg %p187
        %s401 = sand.u32 %s177, 1
        %s402 = scalar_lea.sflag [#allocation4], %s401
        %s403 = sand.u32 %s177, 1
        %s404 = smul.addr %s403, 256
        %s405 = scalar_lea.vmem [#allocation11], %s404
        %p406 = pneg %p218
        %p407 = pneg %p215
        %s408 = sand.u32 %s205, 1
        %s409 = scalar_lea.sflag [#allocation13], %s408
        %s410 = sand.u32 %s205, 1
        %s411 = smul.addr %s410, 256
        %s412 = scalar_lea.vmem [#allocation12], %s411
        %s413 = smul.u32 4, %s36
        %s414 = smul.u32 4, %s36
        %s415 = smul.u32 4, %s36
        %s416 = smul.u32 4, %s36
        %v417 = vld [vmem:[#allocation8] sm:$0xff]
        %v418 = vld [vmem:[#allocation8 + $0x8] sm:$0xff]
        %v419 = vld [vmem:[#allocation8 + $0x10] sm:$0xff]
        %v420 = vld [vmem:[#allocation8 + $0x18] sm:$0xff]
        %v421 = vld [vmem:[#allocation10] sm:$0xff]
        %v422 = vld [vmem:[#allocation10 + $0x8] sm:$0xff]
        %v423 = vld [vmem:[#allocation10 + $0x10] sm:$0xff]
        %v424 = vld [vmem:[#allocation10 + $0x18] sm:$0xff]
        %v425 = vld [vmem:[%s361] sm:$0xff]
        %v426 = vld [vmem:[%s361 + $0x8] sm:$0xff]
        %v427 = vld [vmem:[%s361 + $0x10] sm:$0xff]
        %v428 = vld [vmem:[%s361 + $0x18] sm:$0xff]
        %v429 = vld [vmem:[%s361 + $0x20] sm:$0xff]
        %v430 = vld [vmem:[%s361 + $0x28] sm:$0xff]
        %v431 = vld [vmem:[%s361 + $0x30] sm:$0xff]
        %v432 = vld [vmem:[%s361 + $0x38] sm:$0xff]
        %v433 = vld [vmem:[%s343] sm:$0xff]
        %v434 = vld [vmem:[%s343 + $0x8] sm:$0xff]
        %v435 = vld [vmem:[%s343 + $0x10] sm:$0xff]
        %v436 = vld [vmem:[%s343 + $0x18] sm:$0xff]
        %v437 = vld [vmem:[%s343 + $0x20] sm:$0xff]
        %v438 = vld [vmem:[%s343 + $0x28] sm:$0xff]
        %v439 = vld [vmem:[%s343 + $0x30] sm:$0xff]
        %v440 = vld [vmem:[%s343 + $0x38] sm:$0xff]
        %v441 = vld [vmem:[%s352] sm:$0xff]
        %v442 = vld [vmem:[%s352 + $0x8] sm:$0xff]
        %v443 = vld [vmem:[%s352 + $0x10] sm:$0xff]
        %v444 = vld [vmem:[%s352 + $0x18] sm:$0xff]
        %v445 = vld [vmem:[%s352 + $0x20] sm:$0xff]
        %v446 = vld [vmem:[%s352 + $0x28] sm:$0xff]
        %v447 = vld [vmem:[%s352 + $0x30] sm:$0xff]
        %v448 = vld [vmem:[%s352 + $0x38] sm:$0xff]
        %vm449 = vcmask 261120
        %v451 = vsel %vm449, %v417, 0
        %v454 = vsel %vm449, %v418, 0
        %v457 = vsel %vm449, %v419, 0
        %v460 = vsel %vm449, %v420, 0
        %462 = vmatprep.subr.mxu0 %v434
        %463 = vmatpush1.msra.mxu0 %v433
        %464 = vmatprep.subr.mxu0 %v436
        %465 = vmatpush1.msra.mxu0 %v435
        %466 = vmatprep.subr.mxu0 %v438
        %467 = vmatpush1.msra.mxu0 %v437
        %468 = vmatprep.subr.mxu0 %v440
        %469 = vmatpush1.msra.mxu0 %v439
        %470 = vmatprep.subr.mxu0 0.0
        %471 = vmatpush1.msra.mxu0 0.0
        %472 = vmatprep.subr.mxu0 0.0
        %473 = vmatpush1.msra.mxu0 0.0
        %474 = vmatprep.subr.mxu0 0.0
        %475 = vmatpush1.msra.mxu0 0.0
        %476 = vmatprep.subr.mxu0 0.0
        %477 = vmatpush1.msra.mxu0 0.0
        %478 = vmatprep.subr.mxu0 0.0
        %479 = vmatpush1.msra.mxu0 0.0
        %480 = vmatprep.subr.mxu0 0.0
        %481 = vmatpush1.msra.mxu0 0.0
        %482 = vmatprep.subr.mxu0 0.0
        %483 = vmatpush1.msra.mxu0 0.0
        %484 = vmatprep.subr.mxu0 0.0
        %485 = vmatpush1.msra.mxu0 0.0
        %486 = vmatprep.subr.mxu0 0.0
        %487 = vmatpush1.msra.mxu0 0.0
        %488 = vmatprep.subr.mxu0 0.0
        %489 = vmatpush1.msra.mxu0 0.0
        %490 = vmatprep.subr.mxu0 0.0
        %491 = vmatpush1.msra.mxu0 0.0
        %492 = vmatprep.subr.mxu0 0.0
        %493 = vmatpush1.msra.mxu0 0.0
        %494 = vmatprep.subr.mxu0 0.0
        %495 = vmatpush1.msra.mxu0 0.0
        %496 = vmatprep.subr.mxu0 0.0
        %497 = vmatpush1.msra.mxu0 0.0
        %498 = vmatprep.subr.mxu0 0.0
        %499 = vmatpush1.msra.mxu0 0.0
        %500 = vmatprep.subr.mxu0 0.0
        %501 = vmatpush1.msra.mxu0 0.0
        %502 = vmatprep.subr.mxu0 0.0
        %503 = vmatpush1.msra.mxu0 0.0
        %504 = vmatprep.subr.mxu0 0.0
        %505 = vmatpush1.msra.mxu0 0.0
        %506 = vmatprep.subr.mxu0 0.0
        %507 = vmatpush1.msra.mxu0 0.0
        %508 = vmatprep.subr.mxu0 0.0
        %509 = vmatpush1.msra.mxu0 0.0
        %510 = vmatprep.subr.mxu0 0.0
        %511 = vmatpush1.msra.mxu0 0.0
        %512 = vmatprep.subr.mxu0 0.0
        %513 = vmatpush1.msra.mxu0 0.0
        %514 = vmatprep.subr.mxu0 0.0
        %515 = vmatpush1.msra.mxu0 0.0
        %516 = vmatprep.subr.mxu0 0.0
        %517 = vmatpush1.msra.mxu0 0.0
        %518 = vmatprep.subr.mxu0 0.0
        %519 = vmatpush1.msra.mxu0 0.0
        %520 = vmatprep.subr.mxu0 0.0
        %521 = vmatpush1.msra.mxu0 0.0
        %522 = vmatprep.subr.mxu0 0.0
        %523 = vmatpush1.msra.mxu0 0.0
        %524 = vmatprep.subr.mxu0 0.0
        %525 = vmatpush1.msra.mxu0 0.0
        %526 = vmatprep.mubr.f32.mxu0 0.0
        %527 = vmatmul.mubr.f32.gmra.mrb[0].mxu0 %v451
        %v528 = vpop.f32.mrb[0].mxu0
        %v529 = vadd.f32 %v425, %v528
        %v530 = vpop.f32.mrb[0].mxu0
        %v531 = vadd.f32 %v426, %v530
        %532 = vmatprep.mubr.f32.mxu0 0.0
        %533 = vmatmul.mubr.f32.gmra.mrb[0].mxu0 %v454
        %v534 = vpop.f32.mrb[0].mxu0
        %v535 = vadd.f32 %v427, %v534
        %v536 = vpop.f32.mrb[0].mxu0
        %v537 = vadd.f32 %v428, %v536
        %538 = vmatprep.mubr.f32.mxu0 0.0
        %539 = vmatmul.mubr.f32.gmra.mrb[0].mxu0 %v457
        %v540 = vpop.f32.mrb[0].mxu0
        %v541 = vadd.f32 %v429, %v540
        %v542 = vpop.f32.mrb[0].mxu0
        %v543 = vadd.f32 %v430, %v542
        %544 = vmatprep.mubr.f32.mxu0 0.0
        %545 = vmatmul.mubr.f32.gmra.mrb[0].mxu0 %v460
        %v546 = vpop.f32.mrb[0].mxu0
        %v547 = vadd.f32 %v431, %v546
        %v548 = vpop.f32.mrb[0].mxu0
        %v549 = vadd.f32 %v432, %v548
        %550 = vdwg.mxu0
        %551 = vmatprep.subr.mxu0 %v442
        %552 = vmatpush1.msra.mxu0 %v441
        %553 = vmatprep.subr.mxu0 %v444
        %554 = vmatpush1.msra.mxu0 %v443
        %555 = vmatprep.subr.mxu0 %v446
        %556 = vmatpush1.msra.mxu0 %v445
        %557 = vmatprep.subr.mxu0 %v448
        %558 = vmatpush1.msra.mxu0 %v447
        %559 = vmatprep.subr.mxu0 0.0
        %560 = vmatpush1.msra.mxu0 0.0
        %561 = vmatprep.subr.mxu0 0.0
        %562 = vmatpush1.msra.mxu0 0.0
        %563 = vmatprep.subr.mxu0 0.0
        %564 = vmatpush1.msra.mxu0 0.0
        %565 = vmatprep.subr.mxu0 0.0
        %566 = vmatpush1.msra.mxu0 0.0
        %567 = vmatprep.subr.mxu0 0.0
        %568 = vmatpush1.msra.mxu0 0.0
        %569 = vmatprep.subr.mxu0 0.0
        %570 = vmatpush1.msra.mxu0 0.0
        %571 = vmatprep.subr.mxu0 0.0
        %572 = vmatpush1.msra.mxu0 0.0
        %573 = vmatprep.subr.mxu0 0.0
        %574 = vmatpush1.msra.mxu0 0.0
        %575 = vmatprep.subr.mxu0 0.0
        %576 = vmatpush1.msra.mxu0 0.0
        %577 = vmatprep.subr.mxu0 0.0
        %578 = vmatpush1.msra.mxu0 0.0
        %579 = vmatprep.subr.mxu0 0.0
        %580 = vmatpush1.msra.mxu0 0.0
        %581 = vmatprep.subr.mxu0 0.0
        %582 = vmatpush1.msra.mxu0 0.0
        %583 = vmatprep.subr.mxu0 0.0
        %584 = vmatpush1.msra.mxu0 0.0
        %585 = vmatprep.subr.mxu0 0.0
        %586 = vmatpush1.msra.mxu0 0.0
        %587 = vmatprep.subr.mxu0 0.0
        %588 = vmatpush1.msra.mxu0 0.0
        %589 = vmatprep.subr.mxu0 0.0
        %590 = vmatpush1.msra.mxu0 0.0
        %591 = vmatprep.subr.mxu0 0.0
        %592 = vmatpush1.msra.mxu0 0.0
        %593 = vmatprep.subr.mxu0 0.0
        %594 = vmatpush1.msra.mxu0 0.0
        %595 = vmatprep.subr.mxu0 0.0
        %596 = vmatpush1.msra.mxu0 0.0
        %597 = vmatprep.subr.mxu0 0.0
        %598 = vmatpush1.msra.mxu0 0.0
        %599 = vmatprep.subr.mxu0 0.0
        %600 = vmatpush1.msra.mxu0 0.0
        %601 = vmatprep.subr.mxu0 0.0
        %602 = vmatpush1.msra.mxu0 0.0
        %603 = vmatprep.subr.mxu0 0.0
        %604 = vmatpush1.msra.mxu0 0.0
        %605 = vmatprep.subr.mxu0 0.0
        %606 = vmatpush1.msra.mxu0 0.0
        %607 = vmatprep.subr.mxu0 0.0
        %608 = vmatpush1.msra.mxu0 0.0
        %609 = vmatprep.subr.mxu0 0.0
        %610 = vmatpush1.msra.mxu0 0.0
        %611 = vmatprep.subr.mxu0 0.0
        %612 = vmatpush1.msra.mxu0 0.0
        %613 = vmatprep.subr.mxu0 0.0
        %614 = vmatpush1.msra.mxu0 0.0
        %615 = vmatprep.mubr.f32.mxu0 0.0
        %616 = vmatmul.mubr.f32.gmra.mrb[0].mxu0 %v451
        %v617 = vpop.f32.mrb[0].mxu0
        %v618 = vadd.f32 %v425, %v617
        %v619 = vpop.f32.mrb[0].mxu0
        %v620 = vadd.f32 %v426, %v619
        %621 = vmatprep.mubr.f32.mxu0 0.0
        %622 = vmatmul.mubr.f32.gmra.mrb[0].mxu0 %v454
        %v623 = vpop.f32.mrb[0].mxu0
        %v624 = vadd.f32 %v427, %v623
        %v625 = vpop.f32.mrb[0].mxu0
        %v626 = vadd.f32 %v428, %v625
        %627 = vmatprep.mubr.f32.mxu0 0.0
        %628 = vmatmul.mubr.f32.gmra.mrb[0].mxu0 %v457
        %v629 = vpop.f32.mrb[0].mxu0
        %v630 = vadd.f32 %v429, %v629
        %v631 = vpop.f32.mrb[0].mxu0
        %v632 = vadd.f32 %v430, %v631
        %633 = vmatprep.mubr.f32.mxu0 0.0
        %634 = vmatmul.mubr.f32.gmra.mrb[0].mxu0 %v460
        %v635 = vpop.f32.mrb[0].mxu0
        %v636 = vadd.f32 %v431, %v635
        %v637 = vpop.f32.mrb[0].mxu0
        %v638 = vadd.f32 %v432, %v637
        %639 = vdwg.mxu0
        %v640 = vtanh.pop %v529
        %v641 = vtanh.pop %v531
        %v642 = vtanh.pop %v618
        %v643 = vtanh.pop %v620
        %v644 = vtanh.pop %v535
        %v645 = vtanh.pop %v537
        %v646 = vtanh.pop %v624
        %v647 = vtanh.pop %v626
        %v648 = vtanh.pop %v541
        %v649 = vtanh.pop %v543
        %v650 = vtanh.pop %v630
        %v651 = vtanh.pop %v632
        %v652 = vtanh.pop %v547
        %v653 = vtanh.pop %v549
        %v654 = vtanh.pop %v636
        %v655 = vtanh.pop %v638
        %v657 = vsel %vm449, %v421, 0
        %v660 = vsel %vm449, %v422, 0
        %v663 = vsel %vm449, %v423, 0
        %v666 = vsel %vm449, %v424, 0
        %668 = vmatprep.subr.mxu0 %v641
        %669 = vmatpush1.msra.mxu0 %v640
        %670 = vmatprep.subr.mxu0 %v645
        %671 = vmatpush1.msra.mxu0 %v644
        %672 = vmatprep.subr.mxu0 %v649
        %673 = vmatpush1.msra.mxu0 %v648
        %674 = vmatprep.subr.mxu0 %v653
        %675 = vmatpush1.msra.mxu0 %v652
        %676 = vmatprep.subr.mxu0 0.0
        %677 = vmatpush1.msra.mxu0 0.0
        %678 = vmatprep.subr.mxu0 0.0
        %679 = vmatpush1.msra.mxu0 0.0
        %680 = vmatprep.subr.mxu0 0.0
        %681 = vmatpush1.msra.mxu0 0.0
        %682 = vmatprep.subr.mxu0 0.0
        %683 = vmatpush1.msra.mxu0 0.0
        %684 = vmatprep.subr.mxu0 0.0
        %685 = vmatpush1.msra.mxu0 0.0
        %686 = vmatprep.subr.mxu0 0.0
        %687 = vmatpush1.msra.mxu0 0.0
        %688 = vmatprep.subr.mxu0 0.0
        %689 = vmatpush1.msra.mxu0 0.0
        %690 = vmatprep.subr.mxu0 0.0
        %691 = vmatpush1.msra.mxu0 0.0
        %692 = vmatprep.subr.mxu0 0.0
        %693 = vmatpush1.msra.mxu0 0.0
        %694 = vmatprep.subr.mxu0 0.0
        %695 = vmatpush1.msra.mxu0 0.0
        %696 = vmatprep.subr.mxu0 0.0
        %697 = vmatpush1.msra.mxu0 0.0
        %698 = vmatprep.subr.mxu0 0.0
        %699 = vmatpush1.msra.mxu0 0.0
        %700 = vmatprep.subr.mxu0 0.0
        %701 = vmatpush1.msra.mxu0 0.0
        %702 = vmatprep.subr.mxu0 0.0
        %703 = vmatpush1.msra.mxu0 0.0
        %704 = vmatprep.subr.mxu0 0.0
        %705 = vmatpush1.msra.mxu0 0.0
        %706 = vmatprep.subr.mxu0 0.0
        %707 = vmatpush1.msra.mxu0 0.0
        %708 = vmatprep.subr.mxu0 0.0
        %709 = vmatpush1.msra.mxu0 0.0
        %710 = vmatprep.subr.mxu0 0.0
        %711 = vmatpush1.msra.mxu0 0.0
        %712 = vmatprep.subr.mxu0 0.0
        %713 = vmatpush1.msra.mxu0 0.0
        %714 = vmatprep.subr.mxu0 0.0
        %715 = vmatpush1.msra.mxu0 0.0
        %716 = vmatprep.subr.mxu0 0.0
        %717 = vmatpush1.msra.mxu0 0.0
        %718 = vmatprep.subr.mxu0 0.0
        %719 = vmatpush1.msra.mxu0 0.0
        %720 = vmatprep.subr.mxu0 0.0
        %721 = vmatpush1.msra.mxu0 0.0
        %722 = vmatprep.subr.mxu0 0.0
        %723 = vmatpush1.msra.mxu0 0.0
        %724 = vmatprep.subr.mxu0 0.0
        %725 = vmatpush1.msra.mxu0 0.0
        %726 = vmatprep.subr.mxu0 0.0
        %727 = vmatpush1.msra.mxu0 0.0
        %728 = vmatprep.subr.mxu0 0.0
        %729 = vmatpush1.msra.mxu0 0.0
        %730 = vmatprep.subr.mxu0 0.0
        %731 = vmatpush1.msra.mxu0 0.0
        %732 = vmatprep.mubr.f32.mxu0 0.0
        %733 = vmatmul.mubr.f32.gmra.mrb[0].mxu0 %v657
        %v734 = vpop.f32.mrb[0].mxu0
        %v735 = vadd.f32 0.0, %v734
        %v736 = vpop.f32.mrb[0].mxu0
        %v737 = vadd.f32 0.0, %v736
        %738 = vmatprep.mubr.f32.mxu0 0.0
        %739 = vmatmul.mubr.f32.gmra.mrb[0].mxu0 %v660
        %v740 = vpop.f32.mrb[0].mxu0
        %v741 = vadd.f32 0.0, %v740
        %v742 = vpop.f32.mrb[0].mxu0
        %v743 = vadd.f32 0.0, %v742
        %744 = vmatprep.mubr.f32.mxu0 0.0
        %745 = vmatmul.mubr.f32.gmra.mrb[0].mxu0 %v663
        %v746 = vpop.f32.mrb[0].mxu0
        %v747 = vadd.f32 0.0, %v746
        %v748 = vpop.f32.mrb[0].mxu0
        %v749 = vadd.f32 0.0, %v748
        %750 = vmatprep.mubr.f32.mxu0 0.0
        %751 = vmatmul.mubr.f32.gmra.mrb[0].mxu0 %v666
        %v752 = vpop.f32.mrb[0].mxu0
        %v753 = vadd.f32 0.0, %v752
        %v754 = vpop.f32.mrb[0].mxu0
        %v755 = vadd.f32 0.0, %v754
        %756 = vdwg.mxu0
        %757 = vmatprep.subr.mxu0 %v643
        %758 = vmatpush1.msra.mxu0 %v642
        %759 = vmatprep.subr.mxu0 %v647
        %760 = vmatpush1.msra.mxu0 %v646
        %761 = vmatprep.subr.mxu0 %v651
        %762 = vmatpush1.msra.mxu0 %v650
        %763 = vmatprep.subr.mxu0 %v655
        %764 = vmatpush1.msra.mxu0 %v654
        %765 = vmatprep.subr.mxu0 0.0
        %766 = vmatpush1.msra.mxu0 0.0
        %767 = vmatprep.subr.mxu0 0.0
        %768 = vmatpush1.msra.mxu0 0.0
        %769 = vmatprep.subr.mxu0 0.0
        %770 = vmatpush1.msra.mxu0 0.0
        %771 = vmatprep.subr.mxu0 0.0
        %772 = vmatpush1.msra.mxu0 0.0
        %773 = vmatprep.subr.mxu0 0.0
        %774 = vmatpush1.msra.mxu0 0.0
        %775 = vmatprep.subr.mxu0 0.0
        %776 = vmatpush1.msra.mxu0 0.0
        %777 = vmatprep.subr.mxu0 0.0
        %778 = vmatpush1.msra.mxu0 0.0
        %779 = vmatprep.subr.mxu0 0.0
        %780 = vmatpush1.msra.mxu0 0.0
        %781 = vmatprep.subr.mxu0 0.0
        %782 = vmatpush1.msra.mxu0 0.0
        %783 = vmatprep.subr.mxu0 0.0
        %784 = vmatpush1.msra.mxu0 0.0
        %785 = vmatprep.subr.mxu0 0.0
        %786 = vmatpush1.msra.mxu0 0.0
        %787 = vmatprep.subr.mxu0 0.0
        %788 = vmatpush1.msra.mxu0 0.0
        %789 = vmatprep.subr.mxu0 0.0
        %790 = vmatpush1.msra.mxu0 0.0
        %791 = vmatprep.subr.mxu0 0.0
        %792 = vmatpush1.msra.mxu0 0.0
        %793 = vmatprep.subr.mxu0 0.0
        %794 = vmatpush1.msra.mxu0 0.0
        %795 = vmatprep.subr.mxu0 0.0
        %796 = vmatpush1.msra.mxu0 0.0
        %797 = vmatprep.subr.mxu0 0.0
        %798 = vmatpush1.msra.mxu0 0.0
        %799 = vmatprep.subr.mxu0 0.0
        %800 = vmatpush1.msra.mxu0 0.0
        %801 = vmatprep.subr.mxu0 0.0
        %802 = vmatpush1.msra.mxu0 0.0
        %803 = vmatprep.subr.mxu0 0.0
        %804 = vmatpush1.msra.mxu0 0.0
        %805 = vmatprep.subr.mxu0 0.0
        %806 = vmatpush1.msra.mxu0 0.0
        %807 = vmatprep.subr.mxu0 0.0
        %808 = vmatpush1.msra.mxu0 0.0
        %809 = vmatprep.subr.mxu0 0.0
        %810 = vmatpush1.msra.mxu0 0.0
        %811 = vmatprep.subr.mxu0 0.0
        %812 = vmatpush1.msra.mxu0 0.0
        %813 = vmatprep.subr.mxu0 0.0
        %814 = vmatpush1.msra.mxu0 0.0
        %815 = vmatprep.subr.mxu0 0.0
        %816 = vmatpush1.msra.mxu0 0.0
        %817 = vmatprep.subr.mxu0 0.0
        %818 = vmatpush1.msra.mxu0 0.0
        %819 = vmatprep.subr.mxu0 0.0
        %820 = vmatpush1.msra.mxu0 0.0
        %821 = vmatprep.mubr.f32.mxu0 0.0
        %822 = vmatmul.mubr.f32.gmra.mrb[0].mxu0 %v657
        %v823 = vpop.f32.mrb[0].mxu0
        %v824 = vadd.f32 0.0, %v823
        %v825 = vpop.f32.mrb[0].mxu0
        %v826 = vadd.f32 0.0, %v825
        %827 = vmatprep.mubr.f32.mxu0 0.0
        %828 = vmatmul.mubr.f32.gmra.mrb[0].mxu0 %v660
        %v829 = vpop.f32.mrb[0].mxu0
        %v830 = vadd.f32 0.0, %v829
        %v831 = vpop.f32.mrb[0].mxu0
        %v832 = vadd.f32 0.0, %v831
        %833 = vmatprep.mubr.f32.mxu0 0.0
        %834 = vmatmul.mubr.f32.gmra.mrb[0].mxu0 %v663
        %v835 = vpop.f32.mrb[0].mxu0
        %v836 = vadd.f32 0.0, %v835
        %v837 = vpop.f32.mrb[0].mxu0
        %v838 = vadd.f32 0.0, %v837
        %839 = vmatprep.mubr.f32.mxu0 0.0
        %840 = vmatmul.mubr.f32.gmra.mrb[0].mxu0 %v666
        %v841 = vpop.f32.mrb[0].mxu0
        %v842 = vadd.f32 0.0, %v841
        %v843 = vpop.f32.mrb[0].mxu0
        %v844 = vadd.f32 0.0, %v843
        %845 = vdwg.mxu0
        %v846 = vmax.f32 %v735, %v737
        %847 = vmax.xlane.f32.xlu0 %v846
        %v848 = vpop.xlane.xlu0 %847
        %v849 = vmax.f32 %v741, %v743
        %850 = vmax.xlane.f32.xlu0 %v849
        %v851 = vpop.xlane.xlu0 %850
        %v852 = vmax.f32 %v747, %v749
        %853 = vmax.xlane.f32.xlu0 %v852
        %v854 = vpop.xlane.xlu0 %853
        %v855 = vmax.f32 %v753, %v755
        %856 = vmax.xlane.f32.xlu0 %v855
        %v857 = vpop.xlane.xlu0 %856
        %v858 = vsub.f32 %v735, %v848
        %v859 = vsub.f32 %v737, %v848
        %v860 = vsub.f32 %v741, %v851
        %v861 = vsub.f32 %v743, %v851
        %v862 = vsub.f32 %v747, %v854
        %v863 = vsub.f32 %v749, %v854
        %v864 = vsub.f32 %v753, %v857
        %v865 = vsub.f32 %v755, %v857
        %v866 = vmul.f32 %v858, 1.442695
        %v867 = vpow.pop %v866
        %v868 = vmul.f32 %v859, 1.442695
        %v869 = vpow.pop %v868
        %v870 = vmul.f32 %v860, 1.442695
        %v871 = vpow.pop %v870
        %v872 = vmul.f32 %v861, 1.442695
        %v873 = vpow.pop %v872
        %v874 = vmul.f32 %v862, 1.442695
        %v875 = vpow.pop %v874
        %v876 = vmul.f32 %v863, 1.442695
        %v877 = vpow.pop %v876
        %v878 = vmul.f32 %v864, 1.442695
        %v879 = vpow.pop %v878
        %v880 = vmul.f32 %v865, 1.442695
        %v881 = vpow.pop %v880
        %v882 = vadd.f32 %v867, %v869
        %883 = vadd.xlane.f32.xlu0 %v882
        %v884 = vpop.xlane.xlu0 %883
        %v885 = vadd.f32 %v871, %v873
        %886 = vadd.xlane.f32.xlu0 %v885
        %v887 = vpop.xlane.xlu0 %886
        %v888 = vadd.f32 %v875, %v877
        %889 = vadd.xlane.f32.xlu0 %v888
        %v890 = vpop.xlane.xlu0 %889
        %v891 = vadd.f32 %v879, %v881
        %892 = vadd.xlane.f32.xlu0 %v891
        %v893 = vpop.xlane.xlu0 %892
        %v894 = vrcp.pop %v884
        %v895 = vrcp.pop %v887
        %v896 = vrcp.pop %v890
        %v897 = vrcp.pop %v893
        %v898 = vmul.f32 %v867, %v894
        %v899 = vmul.f32 %v869, %v894
        %v900 = vmul.f32 %v871, %v895
        %v901 = vmul.f32 %v873, %v895
        %v902 = vmul.f32 %v875, %v896
        %v903 = vmul.f32 %v877, %v896
        %v904 = vmul.f32 %v879, %v897
        %v905 = vmul.f32 %v881, %v897
        %v906 = vmul.f32 %v898, %v433
        %v907 = vmul.f32 %v899, %v434
        %v908 = vmul.f32 %v900, %v435
        %v909 = vmul.f32 %v901, %v436
        %v910 = vmul.f32 %v902, %v437
        %v911 = vmul.f32 %v903, %v438
        %v912 = vmul.f32 %v904, %v439
        %v913 = vmul.f32 %v905, %v440
        %914 = vst [vmem:[%s405] sm:$0xff] %v906
        %915 = vst [vmem:[%s405 + $0x8] sm:$0xff] %v907
        %916 = vst [vmem:[%s405 + $0x10] sm:$0xff] %v908
        %917 = vst [vmem:[%s405 + $0x18] sm:$0xff] %v909
        %918 = vst [vmem:[%s405 + $0x20] sm:$0xff] %v910
        %919 = vst [vmem:[%s405 + $0x28] sm:$0xff] %v911
        %920 = vst [vmem:[%s405 + $0x30] sm:$0xff] %v912
        %921 = vst [vmem:[%s405 + $0x38] sm:$0xff] %v913
        %v922 = vmax.f32 %v824, %v826
        %923 = vmax.xlane.f32.xlu0 %v922
        %v924 = vpop.xlane.xlu0 %923
        %v925 = vmax.f32 %v830, %v832
        %926 = vmax.xlane.f32.xlu0 %v925
        %v927 = vpop.xlane.xlu0 %926
        %v928 = vmax.f32 %v836, %v838
        %929 = vmax.xlane.f32.xlu0 %v928
        %v930 = vpop.xlane.xlu0 %929
        %v931 = vmax.f32 %v842, %v844
        %932 = vmax.xlane.f32.xlu0 %v931
        %v933 = vpop.xlane.xlu0 %932
        %v934 = vsub.f32 %v824, %v924
        %v935 = vsub.f32 %v826, %v924
        %v936 = vsub.f32 %v830, %v927
        %v937 = vsub.f32 %v832, %v927
        %v938 = vsub.f32 %v836, %v930
        %v939 = vsub.f32 %v838, %v930
        %v940 = vsub.f32 %v842, %v933
        %v941 = vsub.f32 %v844, %v933
        %v942 = vmul.f32 %v934, 1.442695
        %v943 = vpow.pop %v942
        %v944 = vmul.f32 %v935, 1.442695
        %v945 = vpow.pop %v944
        %v946 = vmul.f32 %v936, 1.442695
        %v947 = vpow.pop %v946
        %v948 = vmul.f32 %v937, 1.442695
        %v949 = vpow.pop %v948
        %v950 = vmul.f32 %v938, 1.442695
        %v951 = vpow.pop %v950
        %v952 = vmul.f32 %v939, 1.442695
        %v953 = vpow.pop %v952
        %v954 = vmul.f32 %v940, 1.442695
        %v955 = vpow.pop %v954
        %v956 = vmul.f32 %v941, 1.442695
        %v957 = vpow.pop %v956
        %v958 = vadd.f32 %v943, %v945
        %959 = vadd.xlane.f32.xlu0 %v958
        %v960 = vpop.xlane.xlu0 %959
        %v961 = vadd.f32 %v947, %v949
        %962 = vadd.xlane.f32.xlu0 %v961
        %v963 = vpop.xlane.xlu0 %962
        %v964 = vadd.f32 %v951, %v953
        %965 = vadd.xlane.f32.xlu0 %v964
        %v966 = vpop.xlane.xlu0 %965
        %v967 = vadd.f32 %v955, %v957
        %968 = vadd.xlane.f32.xlu0 %v967
        %v969 = vpop.xlane.xlu0 %968
        %v970 = vrcp.pop %v960
        %v971 = vrcp.pop %v963
        %v972 = vrcp.pop %v966
        %v973 = vrcp.pop %v969
        %v974 = vmul.f32 %v943, %v970
        %v975 = vmul.f32 %v945, %v970
        %v976 = vmul.f32 %v947, %v971
        %v977 = vmul.f32 %v949, %v971
        %v978 = vmul.f32 %v951, %v972
        %v979 = vmul.f32 %v953, %v972
        %v980 = vmul.f32 %v955, %v973
        %v981 = vmul.f32 %v957, %v973
        %v982 = vmul.f32 %v974, %v441
        %v983 = vmul.f32 %v975, %v442
        %v984 = vmul.f32 %v976, %v443
        %v985 = vmul.f32 %v977, %v444
        %v986 = vmul.f32 %v978, %v445
        %v987 = vmul.f32 %v979, %v446
        %v988 = vmul.f32 %v980, %v447
        %v989 = vmul.f32 %v981, %v448
        %990 = vst [vmem:[%s412] sm:$0xff] %v982
        %991 = vst [vmem:[%s412 + $0x8] sm:$0xff] %v983
        %992 = vst [vmem:[%s412 + $0x10] sm:$0xff] %v984
        %993 = vst [vmem:[%s412 + $0x18] sm:$0xff] %v985
        %994 = vst [vmem:[%s412 + $0x20] sm:$0xff] %v986
        %995 = vst [vmem:[%s412 + $0x28] sm:$0xff] %v987
        %996 = vst [vmem:[%s412 + $0x30] sm:$0xff] %v988
        %997 = vst [vmem:[%s412 + $0x38] sm:$0xff] %v989
        %s998 = scalar_lea.vmem %s343, 64 [#allocation2]
        %v999 = vld [vmem:[%s998] sm:$0xff]
        %v1000 = vld [vmem:[%s998 + $0x8] sm:$0xff]
        %v1001 = vld [vmem:[%s998 + $0x10] sm:$0xff]
        %v1002 = vld [vmem:[%s998 + $0x18] sm:$0xff]
        %v1003 = vld [vmem:[%s998 + $0x20] sm:$0xff]
        %v1004 = vld [vmem:[%s998 + $0x28] sm:$0xff]
        %v1005 = vld [vmem:[%s998 + $0x30] sm:$0xff]
        %v1006 = vld [vmem:[%s998 + $0x38] sm:$0xff]
        %s1007 = scalar_lea.vmem %s352, 64 [#allocation5]
        %v1008 = vld [vmem:[%s1007] sm:$0xff]
        %v1009 = vld [vmem:[%s1007 + $0x8] sm:$0xff]
        %v1010 = vld [vmem:[%s1007 + $0x10] sm:$0xff]
        %v1011 = vld [vmem:[%s1007 + $0x18] sm:$0xff]
        %v1012 = vld [vmem:[%s1007 + $0x20] sm:$0xff]
        %v1013 = vld [vmem:[%s1007 + $0x28] sm:$0xff]
        %v1014 = vld [vmem:[%s1007 + $0x30] sm:$0xff]
        %v1015 = vld [vmem:[%s1007 + $0x38] sm:$0xff]
        %1016 = vmatprep.subr.mxu0 %v1000
        %1017 = vmatpush1.msra.mxu0 %v999
        %1018 = vmatprep.subr.mxu0 %v1002
        %1019 = vmatpush1.msra.mxu0 %v1001
        %1020 = vmatprep.subr.mxu0 %v1004
        %1021 = vmatpush1.msra.mxu0 %v1003
        %1022 = vmatprep.subr.mxu0 %v1006
        %1023 = vmatpush1.msra.mxu0 %v1005
        %1024 = vmatprep.subr.mxu0 0.0
        %1025 = vmatpush1.msra.mxu0 0.0
        %1026 = vmatprep.subr.mxu0 0.0
        %1027 = vmatpush1.msra.mxu0 0.0
        %1028 = vmatprep.subr.mxu0 0.0
        %1029 = vmatpush1.msra.mxu0 0.0
        %1030 = vmatprep.subr.mxu0 0.0
        %1031 = vmatpush1.msra.mxu0 0.0
        %1032 = vmatprep.subr.mxu0 0.0
        %1033 = vmatpush1.msra.mxu0 0.0
        %1034 = vmatprep.subr.mxu0 0.0
        %1035 = vmatpush1.msra.mxu0 0.0
        %1036 = vmatprep.subr.mxu0 0.0
        %1037 = vmatpush1.msra.mxu0 0.0
        %1038 = vmatprep.subr.mxu0 0.0
        %1039 = vmatpush1.msra.mxu0 0.0
        %1040 = vmatprep.subr.mxu0 0.0
        %1041 = vmatpush1.msra.mxu0 0.0
        %1042 = vmatprep.subr.mxu0 0.0
        %1043 = vmatpush1.msra.mxu0 0.0
        %1044 = vmatprep.subr.mxu0 0.0
        %1045 = vmatpush1.msra.mxu0 0.0
        %1046 = vmatprep.subr.mxu0 0.0
        %1047 = vmatpush1.msra.mxu0 0.0
        %1048 = vmatprep.subr.mxu0 0.0
        %1049 = vmatpush1.msra.mxu0 0.0
        %1050 = vmatprep.subr.mxu0 0.0
        %1051 = vmatpush1.msra.mxu0 0.0
        %1052 = vmatprep.subr.mxu0 0.0
        %1053 = vmatpush1.msra.mxu0 0.0
        %1054 = vmatprep.subr.mxu0 0.0
        %1055 = vmatpush1.msra.mxu0 0.0
        %1056 = vmatprep.subr.mxu0 0.0
        %1057 = vmatpush1.msra.mxu0 0.0
        %1058 = vmatprep.subr.mxu0 0.0
        %1059 = vmatpush1.msra.mxu0 0.0
        %1060 = vmatprep.subr.mxu0 0.0
        %1061 = vmatpush1.msra.mxu0 0.0
        %1062 = vmatprep.subr.mxu0 0.0
        %1063 = vmatpush1.msra.mxu0 0.0
        %1064 = vmatprep.subr.mxu0 0.0
        %1065 = vmatpush1.msra.mxu0 0.0
        %1066 = vmatprep.subr.mxu0 0.0
        %1067 = vmatpush1.msra.mxu0 0.0
        %1068 = vmatprep.subr.mxu0 0.0
        %1069 = vmatpush1.msra.mxu0 0.0
        %1070 = vmatprep.subr.mxu0 0.0
        %1071 = vmatpush1.msra.mxu0 0.0
        %1072 = vmatprep.subr.mxu0 0.0
        %1073 = vmatpush1.msra.mxu0 0.0
        %1074 = vmatprep.subr.mxu0 0.0
        %1075 = vmatpush1.msra.mxu0 0.0
        %1076 = vmatprep.subr.mxu0 0.0
        %1077 = vmatpush1.msra.mxu0 0.0
        %1078 = vmatprep.subr.mxu0 0.0
        %1079 = vmatpush1.msra.mxu0 0.0
        %1080 = vmatprep.mubr.f32.mxu0 0.0
        %1081 = vmatmul.mubr.f32.gmra.mrb[0].mxu0 %v451
        %v1082 = vpop.f32.mrb[0].mxu0
        %v1083 = vadd.f32 %v425, %v1082
        %v1084 = vpop.f32.mrb[0].mxu0
        %v1085 = vadd.f32 %v426, %v1084
        %1086 = vmatprep.mubr.f32.mxu0 0.0
        %1087 = vmatmul.mubr.f32.gmra.mrb[0].mxu0 %v454
        %v1088 = vpop.f32.mrb[0].mxu0
        %v1089 = vadd.f32 %v427, %v1088
        %v1090 = vpop.f32.mrb[0].mxu0
        %v1091 = vadd.f32 %v428, %v1090
        %1092 = vmatprep.mubr.f32.mxu0 0.0
        %1093 = vmatmul.mubr.f32.gmra.mrb[0].mxu0 %v457
        %v1094 = vpop.f32.mrb[0].mxu0
        %v1095 = vadd.f32 %v429, %v1094
        %v1096 = vpop.f32.mrb[0].mxu0
        %v1097 = vadd.f32 %v430, %v1096
        %1098 = vmatprep.mubr.f32.mxu0 0.0
        %1099 = vmatmul.mubr.f32.gmra.mrb[0].mxu0 %v460
        %v1100 = vpop.f32.mrb[0].mxu0
        %v1101 = vadd.f32 %v431, %v1100
        %v1102 = vpop.f32.mrb[0].mxu0
        %v1103 = vadd.f32 %v432, %v1102
        %1104 = vdwg.mxu0
        %1105 = vmatprep.subr.mxu0 %v1009
        %1106 = vmatpush1.msra.mxu0 %v1008
        %1107 = vmatprep.subr.mxu0 %v1011
        %1108 = vmatpush1.msra.mxu0 %v1010
        %1109 = vmatprep.subr.mxu0 %v1013
        %1110 = vmatpush1.msra.mxu0 %v1012
        %1111 = vmatprep.subr.mxu0 %v1015
        %1112 = vmatpush1.msra.mxu0 %v1014
        %1113 = vmatprep.subr.mxu0 0.0
        %1114 = vmatpush1.msra.mxu0 0.0
        %1115 = vmatprep.subr.mxu0 0.0
        %1116 = vmatpush1.msra.mxu0 0.0
        %1117 = vmatprep.subr.mxu0 0.0
        %1118 = vmatpush1.msra.mxu0 0.0
        %1119 = vmatprep.subr.mxu0 0.0
        %1120 = vmatpush1.msra.mxu0 0.0
        %1121 = vmatprep.subr.mxu0 0.0
        %1122 = vmatpush1.msra.mxu0 0.0
        %1123 = vmatprep.subr.mxu0 0.0
        %1124 = vmatpush1.msra.mxu0 0.0
        %1125 = vmatprep.subr.mxu0 0.0
        %1126 = vmatpush1.msra.mxu0 0.0
        %1127 = vmatprep.subr.mxu0 0.0
        %1128 = vmatpush1.msra.mxu0 0.0
        %1129 = vmatprep.subr.mxu0 0.0
        %1130 = vmatpush1.msra.mxu0 0.0
        %1131 = vmatprep.subr.mxu0 0.0
        %1132 = vmatpush1.msra.mxu0 0.0
        %1133 = vmatprep.subr.mxu0 0.0
        %1134 = vmatpush1.msra.mxu0 0.0
        %1135 = vmatprep.subr.mxu0 0.0
        %1136 = vmatpush1.msra.mxu0 0.0
        %1137 = vmatprep.subr.mxu0 0.0
        %1138 = vmatpush1.msra.mxu0 0.0
        %1139 = vmatprep.subr.mxu0 0.0
        %1140 = vmatpush1.msra.mxu0 0.0
        %1141 = vmatprep.subr.mxu0 0.0
        %1142 = vmatpush1.msra.mxu0 0.0
        %1143 = vmatprep.subr.mxu0 0.0
        %1144 = vmatpush1.msra.mxu0 0.0
        %1145 = vmatprep.subr.mxu0 0.0
        %1146 = vmatpush1.msra.mxu0 0.0
        %1147 = vmatprep.subr.mxu0 0.0
        %1148 = vmatpush1.msra.mxu0 0.0
        %1149 = vmatprep.subr.mxu0 0.0
        %1150 = vmatpush1.msra.mxu0 0.0
        %1151 = vmatprep.subr.mxu0 0.0
        %1152 = vmatpush1.msra.mxu0 0.0
        %1153 = vmatprep.subr.mxu0 0.0
        %1154 = vmatpush1.msra.mxu0 0.0
        %1155 = vmatprep.subr.mxu0 0.0
        %1156 = vmatpush1.msra.mxu0 0.0
        %1157 = vmatprep.subr.mxu0 0.0
        %1158 = vmatpush1.msra.mxu0 0.0
        %1159 = vmatprep.subr.mxu0 0.0
        %1160 = vmatpush1.msra.mxu0 0.0
        %1161 = vmatprep.subr.mxu0 0.0
        %1162 = vmatpush1.msra.mxu0 0.0
        %1163 = vmatprep.subr.mxu0 0.0
        %1164 = vmatpush1.msra.mxu0 0.0
        %1165 = vmatprep.subr.mxu0 0.0
        %1166 = vmatpush1.msra.mxu0 0.0
        %1167 = vmatprep.subr.mxu0 0.0
        %1168 = vmatpush1.msra.mxu0 0.0
        %1169 = vmatprep.mubr.f32.mxu0 0.0
        %1170 = vmatmul.mubr.f32.gmra.mrb[0].mxu0 %v451
        %v1171 = vpop.f32.mrb[0].mxu0
        %v1172 = vadd.f32 %v425, %v1171
        %v1173 = vpop.f32.mrb[0].mxu0
        %v1174 = vadd.f32 %v426, %v1173
        %1175 = vmatprep.mubr.f32.mxu0 0.0
        %1176 = vmatmul.mubr.f32.gmra.mrb[0].mxu0 %v454
        %v1177 = vpop.f32.mrb[0].mxu0
        %v1178 = vadd.f32 %v427, %v1177
        %v1179 = vpop.f32.mrb[0].mxu0
        %v1180 = vadd.f32 %v428, %v1179
        %1181 = vmatprep.mubr.f32.mxu0 0.0
        %1182 = vmatmul.mubr.f32.gmra.mrb[0].mxu0 %v457
        %v1183 = vpop.f32.mrb[0].mxu0
        %v1184 = vadd.f32 %v429, %v1183
        %v1185 = vpop.f32.mrb[0].mxu0
        %v1186 = vadd.f32 %v430, %v1185
        %1187 = vmatprep.mubr.f32.mxu0 0.0
        %1188 = vmatmul.mubr.f32.gmra.mrb[0].mxu0 %v460
        %v1189 = vpop.f32.mrb[0].mxu0
        %v1190 = vadd.f32 %v431, %v1189
        %v1191 = vpop.f32.mrb[0].mxu0
        %v1192 = vadd.f32 %v432, %v1191
        %1193 = vdwg.mxu0
        %v1194 = vtanh.pop %v1083
        %v1195 = vtanh.pop %v1085
        %v1196 = vtanh.pop %v1172
        %v1197 = vtanh.pop %v1174
        %v1198 = vtanh.pop %v1089
        %v1199 = vtanh.pop %v1091
        %v1200 = vtanh.pop %v1178
        %v1201 = vtanh.pop %v1180
        %v1202 = vtanh.pop %v1095
        %v1203 = vtanh.pop %v1097
        %v1204 = vtanh.pop %v1184
        %v1205 = vtanh.pop %v1186
        %v1206 = vtanh.pop %v1101
        %v1207 = vtanh.pop %v1103
        %v1208 = vtanh.pop %v1190
        %v1209 = vtanh.pop %v1192
        %1210 = vmatprep.subr.mxu0 %v1195
        %1211 = vmatpush1.msra.mxu0 %v1194
        %1212 = vmatprep.subr.mxu0 %v1199
        %1213 = vmatpush1.msra.mxu0 %v1198
        %1214 = vmatprep.subr.mxu0 %v1203
        %1215 = vmatpush1.msra.mxu0 %v1202
        %1216 = vmatprep.subr.mxu0 %v1207
        %1217 = vmatpush1.msra.mxu0 %v1206
        %1218 = vmatprep.subr.mxu0 0.0
        %1219 = vmatpush1.msra.mxu0 0.0
        %1220 = vmatprep.subr.mxu0 0.0
        %1221 = vmatpush1.msra.mxu0 0.0
        %1222 = vmatprep.subr.mxu0 0.0
        %1223 = vmatpush1.msra.mxu0 0.0
        %1224 = vmatprep.subr.mxu0 0.0
        %1225 = vmatpush1.msra.mxu0 0.0
        %1226 = vmatprep.subr.mxu0 0.0
        %1227 = vmatpush1.msra.mxu0 0.0
        %1228 = vmatprep.subr.mxu0 0.0
        %1229 = vmatpush1.msra.mxu0 0.0
        %1230 = vmatprep.subr.mxu0 0.0
        %1231 = vmatpush1.msra.mxu0 0.0
        %1232 = vmatprep.subr.mxu0 0.0
        %1233 = vmatpush1.msra.mxu0 0.0
        %1234 = vmatprep.subr.mxu0 0.0
        %1235 = vmatpush1.msra.mxu0 0.0
        %1236 = vmatprep.subr.mxu0 0.0
        %1237 = vmatpush1.msra.mxu0 0.0
        %1238 = vmatprep.subr.mxu0 0.0
        %1239 = vmatpush1.msra.mxu0 0.0
        %1240 = vmatprep.subr.mxu0 0.0
        %1241 = vmatpush1.msra.mxu0 0.0
        %1242 = vmatprep.subr.mxu0 0.0
        %1243 = vmatpush1.msra.mxu0 0.0
        %1244 = vmatprep.subr.mxu0 0.0
        %1245 = vmatpush1.msra.mxu0 0.0
        %1246 = vmatprep.subr.mxu0 0.0
        %1247 = vmatpush1.msra.mxu0 0.0
        %1248 = vmatprep.subr.mxu0 0.0
        %1249 = vmatpush1.msra.mxu0 0.0
        %1250 = vmatprep.subr.mxu0 0.0
        %1251 = vmatpush1.msra.mxu0 0.0
        %1252 = vmatprep.subr.mxu0 0.0
        %1253 = vmatpush1.msra.mxu0 0.0
        %1254 = vmatprep.subr.mxu0 0.0
        %1255 = vmatpush1.msra.mxu0 0.0
        %1256 = vmatprep.subr.mxu0 0.0
        %1257 = vmatpush1.msra.mxu0 0.0
        %1258 = vmatprep.subr.mxu0 0.0
        %1259 = vmatpush1.msra.mxu0 0.0
        %1260 = vmatprep.subr.mxu0 0.0
        %1261 = vmatpush1.msra.mxu0 0.0
        %1262 = vmatprep.subr.mxu0 0.0
        %1263 = vmatpush1.msra.mxu0 0.0
        %1264 = vmatprep.subr.mxu0 0.0
        %1265 = vmatpush1.msra.mxu0 0.0
        %1266 = vmatprep.subr.mxu0 0.0
        %1267 = vmatpush1.msra.mxu0 0.0
        %1268 = vmatprep.subr.mxu0 0.0
        %1269 = vmatpush1.msra.mxu0 0.0
        %1270 = vmatprep.subr.mxu0 0.0
        %1271 = vmatpush1.msra.mxu0 0.0
        %1272 = vmatprep.subr.mxu0 0.0
        %1273 = vmatpush1.msra.mxu0 0.0
        %1274 = vmatprep.mubr.f32.mxu0 0.0
        %1275 = vmatmul.mubr.f32.gmra.mrb[0].mxu0 %v657
        %v1276 = vpop.f32.mrb[0].mxu0
        %v1277 = vadd.f32 0.0, %v1276
        %v1278 = vpop.f32.mrb[0].mxu0
        %v1279 = vadd.f32 0.0, %v1278
        %1280 = vmatprep.mubr.f32.mxu0 0.0
        %1281 = vmatmul.mubr.f32.gmra.mrb[0].mxu0 %v660
        %v1282 = vpop.f32.mrb[0].mxu0
        %v1283 = vadd.f32 0.0, %v1282
        %v1284 = vpop.f32.mrb[0].mxu0
        %v1285 = vadd.f32 0.0, %v1284
        %1286 = vmatprep.mubr.f32.mxu0 0.0
        %1287 = vmatmul.mubr.f32.gmra.mrb[0].mxu0 %v663
        %v1288 = vpop.f32.mrb[0].mxu0
        %v1289 = vadd.f32 0.0, %v1288
        %v1290 = vpop.f32.mrb[0].mxu0
        %v1291 = vadd.f32 0.0, %v1290
        %1292 = vmatprep.mubr.f32.mxu0 0.0
        %1293 = vmatmul.mubr.f32.gmra.mrb[0].mxu0 %v666
        %v1294 = vpop.f32.mrb[0].mxu0
        %v1295 = vadd.f32 0.0, %v1294
        %v1296 = vpop.f32.mrb[0].mxu0
        %v1297 = vadd.f32 0.0, %v1296
        %1298 = vdwg.mxu0
        %1299 = vmatprep.subr.mxu0 %v1197
        %1300 = vmatpush1.msra.mxu0 %v1196
        %1301 = vmatprep.subr.mxu0 %v1201
        %1302 = vmatpush1.msra.mxu0 %v1200
        %1303 = vmatprep.subr.mxu0 %v1205
        %1304 = vmatpush1.msra.mxu0 %v1204
        %1305 = vmatprep.subr.mxu0 %v1209
        %1306 = vmatpush1.msra.mxu0 %v1208
        %1307 = vmatprep.subr.mxu0 0.0
        %1308 = vmatpush1.msra.mxu0 0.0
        %1309 = vmatprep.subr.mxu0 0.0
        %1310 = vmatpush1.msra.mxu0 0.0
        %1311 = vmatprep.subr.mxu0 0.0
        %1312 = vmatpush1.msra.mxu0 0.0
        %1313 = vmatprep.subr.mxu0 0.0
        %1314 = vmatpush1.msra.mxu0 0.0
        %1315 = vmatprep.subr.mxu0 0.0
        %1316 = vmatpush1.msra.mxu0 0.0
        %1317 = vmatprep.subr.mxu0 0.0
        %1318 = vmatpush1.msra.mxu0 0.0
        %1319 = vmatprep.subr.mxu0 0.0
        %1320 = vmatpush1.msra.mxu0 0.0
        %1321 = vmatprep.subr.mxu0 0.0
        %1322 = vmatpush1.msra.mxu0 0.0
        %1323 = vmatprep.subr.mxu0 0.0
        %1324 = vmatpush1.msra.mxu0 0.0
        %1325 = vmatprep.subr.mxu0 0.0
        %1326 = vmatpush1.msra.mxu0 0.0
        %1327 = vmatprep.subr.mxu0 0.0
        %1328 = vmatpush1.msra.mxu0 0.0
        %1329 = vmatprep.subr.mxu0 0.0
        %1330 = vmatpush1.msra.mxu0 0.0
        %1331 = vmatprep.subr.mxu0 0.0
        %1332 = vmatpush1.msra.mxu0 0.0
        %1333 = vmatprep.subr.mxu0 0.0
        %1334 = vmatpush1.msra.mxu0 0.0
        %1335 = vmatprep.subr.mxu0 0.0
        %1336 = vmatpush1.msra.mxu0 0.0
        %1337 = vmatprep.subr.mxu0 0.0
        %1338 = vmatpush1.msra.mxu0 0.0
        %1339 = vmatprep.subr.mxu0 0.0
        %1340 = vmatpush1.msra.mxu0 0.0
        %1341 = vmatprep.subr.mxu0 0.0
        %1342 = vmatpush1.msra.mxu0 0.0
        %1343 = vmatprep.subr.mxu0 0.0
        %1344 = vmatpush1.msra.mxu0 0.0
        %1345 = vmatprep.subr.mxu0 0.0
        %1346 = vmatpush1.msra.mxu0 0.0
        %1347 = vmatprep.subr.mxu0 0.0
        %1348 = vmatpush1.msra.mxu0 0.0
        %1349 = vmatprep.subr.mxu0 0.0
        %1350 = vmatpush1.msra.mxu0 0.0
        %1351 = vmatprep.subr.mxu0 0.0
        %1352 = vmatpush1.msra.mxu0 0.0
        %1353 = vmatprep.subr.mxu0 0.0
        %1354 = vmatpush1.msra.mxu0 0.0
        %1355 = vmatprep.subr.mxu0 0.0
        %1356 = vmatpush1.msra.mxu0 0.0
        %1357 = vmatprep.subr.mxu0 0.0
        %1358 = vmatpush1.msra.mxu0 0.0
        %1359 = vmatprep.subr.mxu0 0.0
        %1360 = vmatpush1.msra.mxu0 0.0
        %1361 = vmatprep.subr.mxu0 0.0
        %1362 = vmatpush1.msra.mxu0 0.0
        %1363 = vmatprep.mubr.f32.mxu0 0.0
        %1364 = vmatmul.mubr.f32.gmra.mrb[0].mxu0 %v657
        %v1365 = vpop.f32.mrb[0].mxu0
        %v1366 = vadd.f32 0.0, %v1365
        %v1367 = vpop.f32.mrb[0].mxu0
        %v1368 = vadd.f32 0.0, %v1367
        %1369 = vmatprep.mubr.f32.mxu0 0.0
        %1370 = vmatmul.mubr.f32.gmra.mrb[0].mxu0 %v660
        %v1371 = vpop.f32.mrb[0].mxu0
        %v1372 = vadd.f32 0.0, %v1371
        %v1373 = vpop.f32.mrb[0].mxu0
        %v1374 = vadd.f32 0.0, %v1373
        %1375 = vmatprep.mubr.f32.mxu0 0.0
        %1376 = vmatmul.mubr.f32.gmra.mrb[0].mxu0 %v663
        %v1377 = vpop.f32.mrb[0].mxu0
        %v1378 = vadd.f32 0.0, %v1377
        %v1379 = vpop.f32.mrb[0].mxu0
        %v1380 = vadd.f32 0.0, %v1379
        %1381 = vmatprep.mubr.f32.mxu0 0.0
        %1382 = vmatmul.mubr.f32.gmra.mrb[0].mxu0 %v666
        %v1383 = vpop.f32.mrb[0].mxu0
        %v1384 = vadd.f32 0.0, %v1383
        %v1385 = vpop.f32.mrb[0].mxu0
        %v1386 = vadd.f32 0.0, %v1385
        %1387 = vdwg.mxu0
        %v1388 = vmax.f32 %v1277, %v1279
        %1389 = vmax.xlane.f32.xlu0 %v1388
        %v1390 = vpop.xlane.xlu0 %1389
        %v1391 = vmax.f32 %v1283, %v1285
        %1392 = vmax.xlane.f32.xlu0 %v1391
        %v1393 = vpop.xlane.xlu0 %1392
        %v1394 = vmax.f32 %v1289, %v1291
        %1395 = vmax.xlane.f32.xlu0 %v1394
        %v1396 = vpop.xlane.xlu0 %1395
        %v1397 = vmax.f32 %v1295, %v1297
        %1398 = vmax.xlane.f32.xlu0 %v1397
        %v1399 = vpop.xlane.xlu0 %1398
        %v1400 = vsub.f32 %v1277, %v1390
        %v1401 = vsub.f32 %v1279, %v1390
        %v1402 = vsub.f32 %v1283, %v1393
        %v1403 = vsub.f32 %v1285, %v1393
        %v1404 = vsub.f32 %v1289, %v1396
        %v1405 = vsub.f32 %v1291, %v1396
        %v1406 = vsub.f32 %v1295, %v1399
        %v1407 = vsub.f32 %v1297, %v1399
        %v1408 = vmul.f32 %v1400, 1.442695
        %v1409 = vpow.pop %v1408
        %v1410 = vmul.f32 %v1401, 1.442695
        %v1411 = vpow.pop %v1410
        %v1412 = vmul.f32 %v1402, 1.442695
        %v1413 = vpow.pop %v1412
        %v1414 = vmul.f32 %v1403, 1.442695
        %v1415 = vpow.pop %v1414
        %v1416 = vmul.f32 %v1404, 1.442695
        %v1417 = vpow.pop %v1416
        %v1418 = vmul.f32 %v1405, 1.442695
        %v1419 = vpow.pop %v1418
        %v1420 = vmul.f32 %v1406, 1.442695
        %v1421 = vpow.pop %v1420
        %v1422 = vmul.f32 %v1407, 1.442695
        %v1423 = vpow.pop %v1422
        %v1424 = vadd.f32 %v1409, %v1411
        %1425 = vadd.xlane.f32.xlu0 %v1424
        %v1426 = vpop.xlane.xlu0 %1425
        %v1427 = vadd.f32 %v1413, %v1415
        %1428 = vadd.xlane.f32.xlu0 %v1427
        %v1429 = vpop.xlane.xlu0 %1428
        %v1430 = vadd.f32 %v1417, %v1419
        %1431 = vadd.xlane.f32.xlu0 %v1430
        %v1432 = vpop.xlane.xlu0 %1431
        %v1433 = vadd.f32 %v1421, %v1423
        %1434 = vadd.xlane.f32.xlu0 %v1433
        %v1435 = vpop.xlane.xlu0 %1434
        %v1436 = vrcp.pop %v1426
        %v1437 = vrcp.pop %v1429
        %v1438 = vrcp.pop %v1432
        %v1439 = vrcp.pop %v1435
        %v1440 = vmul.f32 %v1409, %v1436
        %v1441 = vmul.f32 %v1411, %v1436
        %v1442 = vmul.f32 %v1413, %v1437
        %v1443 = vmul.f32 %v1415, %v1437
        %v1444 = vmul.f32 %v1417, %v1438
        %v1445 = vmul.f32 %v1419, %v1438
        %v1446 = vmul.f32 %v1421, %v1439
        %v1447 = vmul.f32 %v1423, %v1439
        %v1448 = vmul.f32 %v1440, %v999
        %v1449 = vmul.f32 %v1441, %v1000
        %v1450 = vmul.f32 %v1442, %v1001
        %v1451 = vmul.f32 %v1443, %v1002
        %v1452 = vmul.f32 %v1444, %v1003
        %v1453 = vmul.f32 %v1445, %v1004
        %v1454 = vmul.f32 %v1446, %v1005
        %v1455 = vmul.f32 %v1447, %v1006
        %s1456 = scalar_lea.vmem %s405, 64 [#allocation11]
        %1457 = vst [vmem:[%s1456] sm:$0xff] %v1448
        %1458 = vst [vmem:[%s1456 + $0x8] sm:$0xff] %v1449
        %1459 = vst [vmem:[%s1456 + $0x10] sm:$0xff] %v1450
        %1460 = vst [vmem:[%s1456 + $0x18] sm:$0xff] %v1451
        %1461 = vst [vmem:[%s1456 + $0x20] sm:$0xff] %v1452
        %1462 = vst [vmem:[%s1456 + $0x28] sm:$0xff] %v1453
        %1463 = vst [vmem:[%s1456 + $0x30] sm:$0xff] %v1454
        %1464 = vst [vmem:[%s1456 + $0x38] sm:$0xff] %v1455
        %v1465 = vmax.f32 %v1366, %v1368
        %1466 = vmax.xlane.f32.xlu0 %v1465
        %v1467 = vpop.xlane.xlu0 %1466
        %v1468 = vmax.f32 %v1372, %v1374
        %1469 = vmax.xlane.f32.xlu0 %v1468
        %v1470 = vpop.xlane.xlu0 %1469
        %v1471 = vmax.f32 %v1378, %v1380
        %1472 = vmax.xlane.f32.xlu0 %v1471
        %v1473 = vpop.xlane.xlu0 %1472
        %v1474 = vmax.f32 %v1384, %v1386
        %1475 = vmax.xlane.f32.xlu0 %v1474
        %v1476 = vpop.xlane.xlu0 %1475
        %v1477 = vsub.f32 %v1366, %v1467
        %v1478 = vsub.f32 %v1368, %v1467
        %v1479 = vsub.f32 %v1372, %v1470
        %v1480 = vsub.f32 %v1374, %v1470
        %v1481 = vsub.f32 %v1378, %v1473
        %v1482 = vsub.f32 %v1380, %v1473
        %v1483 = vsub.f32 %v1384, %v1476
        %v1484 = vsub.f32 %v1386, %v1476
        %v1485 = vmul.f32 %v1477, 1.442695
        %v1486 = vpow.pop %v1485
        %v1487 = vmul.f32 %v1478, 1.442695
        %v1488 = vpow.pop %v1487
        %v1489 = vmul.f32 %v1479, 1.442695
        %v1490 = vpow.pop %v1489
        %v1491 = vmul.f32 %v1480, 1.442695
        %v1492 = vpow.pop %v1491
        %v1493 = vmul.f32 %v1481, 1.442695
        %v1494 = vpow.pop %v1493
        %v1495 = vmul.f32 %v1482, 1.442695
        %v1496 = vpow.pop %v1495
        %v1497 = vmul.f32 %v1483, 1.442695
        %v1498 = vpow.pop %v1497
        %v1499 = vmul.f32 %v1484, 1.442695
        %v1500 = vpow.pop %v1499
        %v1501 = vadd.f32 %v1486, %v1488
        %1502 = vadd.xlane.f32.xlu0 %v1501
        %v1503 = vpop.xlane.xlu0 %1502
        %v1504 = vadd.f32 %v1490, %v1492
        %1505 = vadd.xlane.f32.xlu0 %v1504
        %v1506 = vpop.xlane.xlu0 %1505
        %v1507 = vadd.f32 %v1494, %v1496
        %1508 = vadd.xlane.f32.xlu0 %v1507
        %v1509 = vpop.xlane.xlu0 %1508
        %v1510 = vadd.f32 %v1498, %v1500
        %1511 = vadd.xlane.f32.xlu0 %v1510
        %v1512 = vpop.xlane.xlu0 %1511
        %v1513 = vrcp.pop %v1503
        %v1514 = vrcp.pop %v1506
        %v1515 = vrcp.pop %v1509
        %v1516 = vrcp.pop %v1512
        %v1517 = vmul.f32 %v1486, %v1513
        %v1518 = vmul.f32 %v1488, %v1513
        %v1519 = vmul.f32 %v1490, %v1514
        %v1520 = vmul.f32 %v1492, %v1514
        %v1521 = vmul.f32 %v1494, %v1515
        %v1522 = vmul.f32 %v1496, %v1515
        %v1523 = vmul.f32 %v1498, %v1516
        %v1524 = vmul.f32 %v1500, %v1516
        %v1525 = vmul.f32 %v1517, %v1008
        %v1526 = vmul.f32 %v1518, %v1009
        %v1527 = vmul.f32 %v1519, %v1010
        %v1528 = vmul.f32 %v1520, %v1011
        %v1529 = vmul.f32 %v1521, %v1012
        %v1530 = vmul.f32 %v1522, %v1013
        %v1531 = vmul.f32 %v1523, %v1014
        %v1532 = vmul.f32 %v1524, %v1015
        %s1533 = scalar_lea.vmem %s412, 64 [#allocation12]
        %1534 = vst [vmem:[%s1533] sm:$0xff] %v1525
        %1535 = vst [vmem:[%s1533 + $0x8] sm:$0xff] %v1526
        %1536 = vst [vmem:[%s1533 + $0x10] sm:$0xff] %v1527
        %1537 = vst [vmem:[%s1533 + $0x18] sm:$0xff] %v1528
        %1538 = vst [vmem:[%s1533 + $0x20] sm:$0xff] %v1529
        %1539 = vst [vmem:[%s1533 + $0x28] sm:$0xff] %v1530
        %1540 = vst [vmem:[%s1533 + $0x30] sm:$0xff] %v1531
        %1541 = vst [vmem:[%s1533 + $0x38] sm:$0xff] %v1532
        %s1542 = scalar_lea.vmem %s343, 128 [#allocation2]
        %v1543 = vld [vmem:[%s1542] sm:$0xff]
        %v1544 = vld [vmem:[%s1542 + $0x8] sm:$0xff]
        %v1545 = vld [vmem:[%s1542 + $0x10] sm:$0xff]
        %v1546 = vld [vmem:[%s1542 + $0x18] sm:$0xff]
        %v1547 = vld [vmem:[%s1542 + $0x20] sm:$0xff]
        %v1548 = vld [vmem:[%s1542 + $0x28] sm:$0xff]
        %v1549 = vld [vmem:[%s1542 + $0x30] sm:$0xff]
        %v1550 = vld [vmem:[%s1542 + $0x38] sm:$0xff]
        %s1551 = scalar_lea.vmem %s352, 128 [#allocation5]
        %v1552 = vld [vmem:[%s1551] sm:$0xff]
        %v1553 = vld [vmem:[%s1551 + $0x8] sm:$0xff]
        %v1554 = vld [vmem:[%s1551 + $0x10] sm:$0xff]
        %v1555 = vld [vmem:[%s1551 + $0x18] sm:$0xff]
        %v1556 = vld [vmem:[%s1551 + $0x20] sm:$0xff]
        %v1557 = vld [vmem:[%s1551 + $0x28] sm:$0xff]
        %v1558 = vld [vmem:[%s1551 + $0x30] sm:$0xff]
        %v1559 = vld [vmem:[%s1551 + $0x38] sm:$0xff]
        %1560 = vmatprep.subr.mxu0 %v1544
        %1561 = vmatpush1.msra.mxu0 %v1543
        %1562 = vmatprep.subr.mxu0 %v1546
        %1563 = vmatpush1.msra.mxu0 %v1545
        %1564 = vmatprep.subr.mxu0 %v1548
        %1565 = vmatpush1.msra.mxu0 %v1547
        %1566 = vmatprep.subr.mxu0 %v1550
        %1567 = vmatpush1.msra.mxu0 %v1549
        %1568 = vmatprep.subr.mxu0 0.0
        %1569 = vmatpush1.msra.mxu0 0.0
        %1570 = vmatprep.subr.mxu0 0.0
        %1571 = vmatpush1.msra.mxu0 0.0
        %1572 = vmatprep.subr.mxu0 0.0
        %1573 = vmatpush1.msra.mxu0 0.0
        %1574 = vmatprep.subr.mxu0 0.0
        %1575 = vmatpush1.msra.mxu0 0.0
        %1576 = vmatprep.subr.mxu0 0.0
        %1577 = vmatpush1.msra.mxu0 0.0
        %1578 = vmatprep.subr.mxu0 0.0
        %1579 = vmatpush1.msra.mxu0 0.0
        %1580 = vmatprep.subr.mxu0 0.0
        %1581 = vmatpush1.msra.mxu0 0.0
        %1582 = vmatprep.subr.mxu0 0.0
        %1583 = vmatpush1.msra.mxu0 0.0
        %1584 = vmatprep.subr.mxu0 0.0
        %1585 = vmatpush1.msra.mxu0 0.0
        %1586 = vmatprep.subr.mxu0 0.0
        %1587 = vmatpush1.msra.mxu0 0.0
        %1588 = vmatprep.subr.mxu0 0.0
        %1589 = vmatpush1.msra.mxu0 0.0
        %1590 = vmatprep.subr.mxu0 0.0
        %1591 = vmatpush1.msra.mxu0 0.0
        %1592 = vmatprep.subr.mxu0 0.0
        %1593 = vmatpush1.msra.mxu0 0.0
        %1594 = vmatprep.subr.mxu0 0.0
        %1595 = vmatpush1.msra.mxu0 0.0
        %1596 = vmatprep.subr.mxu0 0.0
        %1597 = vmatpush1.msra.mxu0 0.0
        %1598 = vmatprep.subr.mxu0 0.0
        %1599 = vmatpush1.msra.mxu0 0.0
        %1600 = vmatprep.subr.mxu0 0.0
        %1601 = vmatpush1.msra.mxu0 0.0
        %1602 = vmatprep.subr.mxu0 0.0
        %1603 = vmatpush1.msra.mxu0 0.0
        %1604 = vmatprep.subr.mxu0 0.0
        %1605 = vmatpush1.msra.mxu0 0.0
        %1606 = vmatprep.subr.mxu0 0.0
        %1607 = vmatpush1.msra.mxu0 0.0
        %1608 = vmatprep.subr.mxu0 0.0
        %1609 = vmatpush1.msra.mxu0 0.0
        %1610 = vmatprep.subr.mxu0 0.0
        %1611 = vmatpush1.msra.mxu0 0.0
        %1612 = vmatprep.subr.mxu0 0.0
        %1613 = vmatpush1.msra.mxu0 0.0
        %1614 = vmatprep.subr.mxu0 0.0
        %1615 = vmatpush1.msra.mxu0 0.0
        %1616 = vmatprep.subr.mxu0 0.0
        %1617 = vmatpush1.msra.mxu0 0.0
        %1618 = vmatprep.subr.mxu0 0.0
        %1619 = vmatpush1.msra.mxu0 0.0
        %1620 = vmatprep.subr.mxu0 0.0
        %1621 = vmatpush1.msra.mxu0 0.0
        %1622 = vmatprep.subr.mxu0 0.0
        %1623 = vmatpush1.msra.mxu0 0.0
        %1624 = vmatprep.mubr.f32.mxu0 0.0
        %1625 = vmatmul.mubr.f32.gmra.mrb[0].mxu0 %v451
        %v1626 = vpop.f32.mrb[0].mxu0
        %v1627 = vadd.f32 %v425, %v1626
        %v1628 = vpop.f32.mrb[0].mxu0
        %v1629 = vadd.f32 %v426, %v1628
        %1630 = vmatprep.mubr.f32.mxu0 0.0
        %1631 = vmatmul.mubr.f32.gmra.mrb[0].mxu0 %v454
        %v1632 = vpop.f32.mrb[0].mxu0
        %v1633 = vadd.f32 %v427, %v1632
        %v1634 = vpop.f32.mrb[0].mxu0
        %v1635 = vadd.f32 %v428, %v1634
        %1636 = vmatprep.mubr.f32.mxu0 0.0
        %1637 = vmatmul.mubr.f32.gmra.mrb[0].mxu0 %v457
        %v1638 = vpop.f32.mrb[0].mxu0
        %v1639 = vadd.f32 %v429, %v1638
        %v1640 = vpop.f32.mrb[0].mxu0
        %v1641 = vadd.f32 %v430, %v1640
        %1642 = vmatprep.mubr.f32.mxu0 0.0
        %1643 = vmatmul.mubr.f32.gmra.mrb[0].mxu0 %v460
        %v1644 = vpop.f32.mrb[0].mxu0
        %v1645 = vadd.f32 %v431, %v1644
        %v1646 = vpop.f32.mrb[0].mxu0
        %v1647 = vadd.f32 %v432, %v1646
        %1648 = vdwg.mxu0
        %1649 = vmatprep.subr.mxu0 %v1553
        %1650 = vmatpush1.msra.mxu0 %v1552
        %1651 = vmatprep.subr.mxu0 %v1555
        %1652 = vmatpush1.msra.mxu0 %v1554
        %1653 = vmatprep.subr.mxu0 %v1557
        %1654 = vmatpush1.msra.mxu0 %v1556
        %1655 = vmatprep.subr.mxu0 %v1559
        %1656 = vmatpush1.msra.mxu0 %v1558
        %1657 = vmatprep.subr.mxu0 0.0
        %1658 = vmatpush1.msra.mxu0 0.0
        %1659 = vmatprep.subr.mxu0 0.0
        %1660 = vmatpush1.msra.mxu0 0.0
        %1661 = vmatprep.subr.mxu0 0.0
        %1662 = vmatpush1.msra.mxu0 0.0
        %1663 = vmatprep.subr.mxu0 0.0
        %1664 = vmatpush1.msra.mxu0 0.0
        %1665 = vmatprep.subr.mxu0 0.0
        %1666 = vmatpush1.msra.mxu0 0.0
        %1667 = vmatprep.subr.mxu0 0.0
        %1668 = vmatpush1.msra.mxu0 0.0
        %1669 = vmatprep.subr.mxu0 0.0
        %1670 = vmatpush1.msra.mxu0 0.0
        %1671 = vmatprep.subr.mxu0 0.0
        %1672 = vmatpush1.msra.mxu0 0.0
        %1673 = vmatprep.subr.mxu0 0.0
        %1674 = vmatpush1.msra.mxu0 0.0
        %1675 = vmatprep.subr.mxu0 0.0
        %1676 = vmatpush1.msra.mxu0 0.0
        %1677 = vmatprep.subr.mxu0 0.0
        %1678 = vmatpush1.msra.mxu0 0.0
        %1679 = vmatprep.subr.mxu0 0.0
        %1680 = vmatpush1.msra.mxu0 0.0
        %1681 = vmatprep.subr.mxu0 0.0
        %1682 = vmatpush1.msra.mxu0 0.0
        %1683 = vmatprep.subr.mxu0 0.0
        %1684 = vmatpush1.msra.mxu0 0.0
        %1685 = vmatprep.subr.mxu0 0.0
        %1686 = vmatpush1.msra.mxu0 0.0
        %1687 = vmatprep.subr.mxu0 0.0
        %1688 = vmatpush1.msra.mxu0 0.0
        %1689 = vmatprep.subr.mxu0 0.0
        %1690 = vmatpush1.msra.mxu0 0.0
        %1691 = vmatprep.subr.mxu0 0.0
        %1692 = vmatpush1.msra.mxu0 0.0
        %1693 = vmatprep.subr.mxu0 0.0
        %1694 = vmatpush1.msra.mxu0 0.0
        %1695 = vmatprep.subr.mxu0 0.0
        %1696 = vmatpush1.msra.mxu0 0.0
        %1697 = vmatprep.subr.mxu0 0.0
        %1698 = vmatpush1.msra.mxu0 0.0
        %1699 = vmatprep.subr.mxu0 0.0
        %1700 = vmatpush1.msra.mxu0 0.0
        %1701 = vmatprep.subr.mxu0 0.0
        %1702 = vmatpush1.msra.mxu0 0.0
        %1703 = vmatprep.subr.mxu0 0.0
        %1704 = vmatpush1.msra.mxu0 0.0
        %1705 = vmatprep.subr.mxu0 0.0
        %1706 = vmatpush1.msra.mxu0 0.0
        %1707 = vmatprep.subr.mxu0 0.0
        %1708 = vmatpush1.msra.mxu0 0.0
        %1709 = vmatprep.subr.mxu0 0.0
        %1710 = vmatpush1.msra.mxu0 0.0
        %1711 = vmatprep.subr.mxu0 0.0
        %1712 = vmatpush1.msra.mxu0 0.0
        %1713 = vmatprep.mubr.f32.mxu0 0.0
        %1714 = vmatmul.mubr.f32.gmra.mrb[0].mxu0 %v451
        %v1715 = vpop.f32.mrb[0].mxu0
        %v1716 = vadd.f32 %v425, %v1715
        %v1717 = vpop.f32.mrb[0].mxu0
        %v1718 = vadd.f32 %v426, %v1717
        %1719 = vmatprep.mubr.f32.mxu0 0.0
        %1720 = vmatmul.mubr.f32.gmra.mrb[0].mxu0 %v454
        %v1721 = vpop.f32.mrb[0].mxu0
        %v1722 = vadd.f32 %v427, %v1721
        %v1723 = vpop.f32.mrb[0].mxu0
        %v1724 = vadd.f32 %v428, %v1723
        %1725 = vmatprep.mubr.f32.mxu0 0.0
        %1726 = vmatmul.mubr.f32.gmra.mrb[0].mxu0 %v457
        %v1727 = vpop.f32.mrb[0].mxu0
        %v1728 = vadd.f32 %v429, %v1727
        %v1729 = vpop.f32.mrb[0].mxu0
        %v1730 = vadd.f32 %v430, %v1729
        %1731 = vmatprep.mubr.f32.mxu0 0.0
        %1732 = vmatmul.mubr.f32.gmra.mrb[0].mxu0 %v460
        %v1733 = vpop.f32.mrb[0].mxu0
        %v1734 = vadd.f32 %v431, %v1733
        %v1735 = vpop.f32.mrb[0].mxu0
        %v1736 = vadd.f32 %v432, %v1735
        %1737 = vdwg.mxu0
        %v1738 = vtanh.pop %v1627
        %v1739 = vtanh.pop %v1629
        %v1740 = vtanh.pop %v1716
        %v1741 = vtanh.pop %v1718
        %v1742 = vtanh.pop %v1633
        %v1743 = vtanh.pop %v1635
        %v1744 = vtanh.pop %v1722
        %v1745 = vtanh.pop %v1724
        %v1746 = vtanh.pop %v1639
        %v1747 = vtanh.pop %v1641
        %v1748 = vtanh.pop %v1728
        %v1749 = vtanh.pop %v1730
        %v1750 = vtanh.pop %v1645
        %v1751 = vtanh.pop %v1647
        %v1752 = vtanh.pop %v1734
        %v1753 = vtanh.pop %v1736
        %1754 = vmatprep.subr.mxu0 %v1739
        %1755 = vmatpush1.msra.mxu0 %v1738
        %1756 = vmatprep.subr.mxu0 %v1743
        %1757 = vmatpush1.msra.mxu0 %v1742
        %1758 = vmatprep.subr.mxu0 %v1747
        %1759 = vmatpush1.msra.mxu0 %v1746
        %1760 = vmatprep.subr.mxu0 %v1751
        %1761 = vmatpush1.msra.mxu0 %v1750
        %1762 = vmatprep.subr.mxu0 0.0
        %1763 = vmatpush1.msra.mxu0 0.0
        %1764 = vmatprep.subr.mxu0 0.0
        %1765 = vmatpush1.msra.mxu0 0.0
        %1766 = vmatprep.subr.mxu0 0.0
        %1767 = vmatpush1.msra.mxu0 0.0
        %1768 = vmatprep.subr.mxu0 0.0
        %1769 = vmatpush1.msra.mxu0 0.0
        %1770 = vmatprep.subr.mxu0 0.0
        %1771 = vmatpush1.msra.mxu0 0.0
        %1772 = vmatprep.subr.mxu0 0.0
        %1773 = vmatpush1.msra.mxu0 0.0
        %1774 = vmatprep.subr.mxu0 0.0
        %1775 = vmatpush1.msra.mxu0 0.0
        %1776 = vmatprep.subr.mxu0 0.0
        %1777 = vmatpush1.msra.mxu0 0.0
        %1778 = vmatprep.subr.mxu0 0.0
        %1779 = vmatpush1.msra.mxu0 0.0
        %1780 = vmatprep.subr.mxu0 0.0
        %1781 = vmatpush1.msra.mxu0 0.0
        %1782 = vmatprep.subr.mxu0 0.0
        %1783 = vmatpush1.msra.mxu0 0.0
        %1784 = vmatprep.subr.mxu0 0.0
        %1785 = vmatpush1.msra.mxu0 0.0
        %1786 = vmatprep.subr.mxu0 0.0
        %1787 = vmatpush1.msra.mxu0 0.0
        %1788 = vmatprep.subr.mxu0 0.0
        %1789 = vmatpush1.msra.mxu0 0.0
        %1790 = vmatprep.subr.mxu0 0.0
        %1791 = vmatpush1.msra.mxu0 0.0
        %1792 = vmatprep.subr.mxu0 0.0
        %1793 = vmatpush1.msra.mxu0 0.0
        %1794 = vmatprep.subr.mxu0 0.0
        %1795 = vmatpush1.msra.mxu0 0.0
        %1796 = vmatprep.subr.mxu0 0.0
        %1797 = vmatpush1.msra.mxu0 0.0
        %1798 = vmatprep.subr.mxu0 0.0
        %1799 = vmatpush1.msra.mxu0 0.0
        %1800 = vmatprep.subr.mxu0 0.0
        %1801 = vmatpush1.msra.mxu0 0.0
        %1802 = vmatprep.subr.mxu0 0.0
        %1803 = vmatpush1.msra.mxu0 0.0
        %1804 = vmatprep.subr.mxu0 0.0
        %1805 = vmatpush1.msra.mxu0 0.0
        %1806 = vmatprep.subr.mxu0 0.0
        %1807 = vmatpush1.msra.mxu0 0.0
        %1808 = vmatprep.subr.mxu0 0.0
        %1809 = vmatpush1.msra.mxu0 0.0
        %1810 = vmatprep.subr.mxu0 0.0
        %1811 = vmatpush1.msra.mxu0 0.0
        %1812 = vmatprep.subr.mxu0 0.0
        %1813 = vmatpush1.msra.mxu0 0.0
        %1814 = vmatprep.subr.mxu0 0.0
        %1815 = vmatpush1.msra.mxu0 0.0
        %1816 = vmatprep.subr.mxu0 0.0
        %1817 = vmatpush1.msra.mxu0 0.0
        %1818 = vmatprep.mubr.f32.mxu0 0.0
        %1819 = vmatmul.mubr.f32.gmra.mrb[0].mxu0 %v657
        %v1820 = vpop.f32.mrb[0].mxu0
        %v1821 = vadd.f32 0.0, %v1820
        %v1822 = vpop.f32.mrb[0].mxu0
        %v1823 = vadd.f32 0.0, %v1822
        %1824 = vmatprep.mubr.f32.mxu0 0.0
        %1825 = vmatmul.mubr.f32.gmra.mrb[0].mxu0 %v660
        %v1826 = vpop.f32.mrb[0].mxu0
        %v1827 = vadd.f32 0.0, %v1826
        %v1828 = vpop.f32.mrb[0].mxu0
        %v1829 = vadd.f32 0.0, %v1828
        %1830 = vmatprep.mubr.f32.mxu0 0.0
        %1831 = vmatmul.mubr.f32.gmra.mrb[0].mxu0 %v663
        %v1832 = vpop.f32.mrb[0].mxu0
        %v1833 = vadd.f32 0.0, %v1832
        %v1834 = vpop.f32.mrb[0].mxu0
        %v1835 = vadd.f32 0.0, %v1834
        %1836 = vmatprep.mubr.f32.mxu0 0.0
        %1837 = vmatmul.mubr.f32.gmra.mrb[0].mxu0 %v666
        %v1838 = vpop.f32.mrb[0].mxu0
        %v1839 = vadd.f32 0.0, %v1838
        %v1840 = vpop.f32.mrb[0].mxu0
        %v1841 = vadd.f32 0.0, %v1840
        %1842 = vdwg.mxu0
        %1843 = vmatprep.subr.mxu0 %v1741
        %1844 = vmatpush1.msra.mxu0 %v1740
        %1845 = vmatprep.subr.mxu0 %v1745
        %1846 = vmatpush1.msra.mxu0 %v1744
        %1847 = vmatprep.subr.mxu0 %v1749
        %1848 = vmatpush1.msra.mxu0 %v1748
        %1849 = vmatprep.subr.mxu0 %v1753
        %1850 = vmatpush1.msra.mxu0 %v1752
        %1851 = vmatprep.subr.mxu0 0.0
        %1852 = vmatpush1.msra.mxu0 0.0
        %1853 = vmatprep.subr.mxu0 0.0
        %1854 = vmatpush1.msra.mxu0 0.0
        %1855 = vmatprep.subr.mxu0 0.0
        %1856 = vmatpush1.msra.mxu0 0.0
        %1857 = vmatprep.subr.mxu0 0.0
        %1858 = vmatpush1.msra.mxu0 0.0
        %1859 = vmatprep.subr.mxu0 0.0
        %1860 = vmatpush1.msra.mxu0 0.0
        %1861 = vmatprep.subr.mxu0 0.0
        %1862 = vmatpush1.msra.mxu0 0.0
        %1863 = vmatprep.subr.mxu0 0.0
        %1864 = vmatpush1.msra.mxu0 0.0
        %1865 = vmatprep.subr.mxu0 0.0
        %1866 = vmatpush1.msra.mxu0 0.0
        %1867 = vmatprep.subr.mxu0 0.0
        %1868 = vmatpush1.msra.mxu0 0.0
        %1869 = vmatprep.subr.mxu0 0.0
        %1870 = vmatpush1.msra.mxu0 0.0
        %1871 = vmatprep.subr.mxu0 0.0
        %1872 = vmatpush1.msra.mxu0 0.0
        %1873 = vmatprep.subr.mxu0 0.0
        %1874 = vmatpush1.msra.mxu0 0.0
        %1875 = vmatprep.subr.mxu0 0.0
        %1876 = vmatpush1.msra.mxu0 0.0
        %1877 = vmatprep.subr.mxu0 0.0
        %1878 = vmatpush1.msra.mxu0 0.0
        %1879 = vmatprep.subr.mxu0 0.0
        %1880 = vmatpush1.msra.mxu0 0.0
        %1881 = vmatprep.subr.mxu0 0.0
        %1882 = vmatpush1.msra.mxu0 0.0
        %1883 = vmatprep.subr.mxu0 0.0
        %1884 = vmatpush1.msra.mxu0 0.0
        %1885 = vmatprep.subr.mxu0 0.0
        %1886 = vmatpush1.msra.mxu0 0.0
        %1887 = vmatprep.subr.mxu0 0.0
        %1888 = vmatpush1.msra.mxu0 0.0
        %1889 = vmatprep.subr.mxu0 0.0
        %1890 = vmatpush1.msra.mxu0 0.0
        %1891 = vmatprep.subr.mxu0 0.0
        %1892 = vmatpush1.msra.mxu0 0.0
        %1893 = vmatprep.subr.mxu0 0.0
        %1894 = vmatpush1.msra.mxu0 0.0
        %1895 = vmatprep.subr.mxu0 0.0
        %1896 = vmatpush1.msra.mxu0 0.0
        %1897 = vmatprep.subr.mxu0 0.0
        %1898 = vmatpush1.msra.mxu0 0.0
        %1899 = vmatprep.subr.mxu0 0.0
        %1900 = vmatpush1.msra.mxu0 0.0
        %1901 = vmatprep.subr.mxu0 0.0
        %1902 = vmatpush1.msra.mxu0 0.0
        %1903 = vmatprep.subr.mxu0 0.0
        %1904 = vmatpush1.msra.mxu0 0.0
        %1905 = vmatprep.subr.mxu0 0.0
        %1906 = vmatpush1.msra.mxu0 0.0
        %1907 = vmatprep.mubr.f32.mxu0 0.0
        %1908 = vmatmul.mubr.f32.gmra.mrb[0].mxu0 %v657
        %v1909 = vpop.f32.mrb[0].mxu0
        %v1910 = vadd.f32 0.0, %v1909
        %v1911 = vpop.f32.mrb[0].mxu0
        %v1912 = vadd.f32 0.0, %v1911
        %1913 = vmatprep.mubr.f32.mxu0 0.0
        %1914 = vmatmul.mubr.f32.gmra.mrb[0].mxu0 %v660
        %v1915 = vpop.f32.mrb[0].mxu0
        %v1916 = vadd.f32 0.0, %v1915
        %v1917 = vpop.f32.mrb[0].mxu0
        %v1918 = vadd.f32 0.0, %v1917
        %1919 = vmatprep.mubr.f32.mxu0 0.0
        %1920 = vmatmul.mubr.f32.gmra.mrb[0].mxu0 %v663
        %v1921 = vpop.f32.mrb[0].mxu0
        %v1922 = vadd.f32 0.0, %v1921
        %v1923 = vpop.f32.mrb[0].mxu0
        %v1924 = vadd.f32 0.0, %v1923
        %1925 = vmatprep.mubr.f32.mxu0 0.0
        %1926 = vmatmul.mubr.f32.gmra.mrb[0].mxu0 %v666
        %v1927 = vpop.f32.mrb[0].mxu0
        %v1928 = vadd.f32 0.0, %v1927
        %v1929 = vpop.f32.mrb[0].mxu0
        %v1930 = vadd.f32 0.0, %v1929
        %1931 = vdwg.mxu0
        %v1932 = vmax.f32 %v1821, %v1823
        %1933 = vmax.xlane.f32.xlu0 %v1932
        %v1934 = vpop.xlane.xlu0 %1933
        %v1935 = vmax.f32 %v1827, %v1829
        %1936 = vmax.xlane.f32.xlu0 %v1935
        %v1937 = vpop.xlane.xlu0 %1936
        %v1938 = vmax.f32 %v1833, %v1835
        %1939 = vmax.xlane.f32.xlu0 %v1938
        %v1940 = vpop.xlane.xlu0 %1939
        %v1941 = vmax.f32 %v1839, %v1841
        %1942 = vmax.xlane.f32.xlu0 %v1941
        %v1943 = vpop.xlane.xlu0 %1942
        %v1944 = vsub.f32 %v1821, %v1934
        %v1945 = vsub.f32 %v1823, %v1934
        %v1946 = vsub.f32 %v1827, %v1937
        %v1947 = vsub.f32 %v1829, %v1937
        %v1948 = vsub.f32 %v1833, %v1940
        %v1949 = vsub.f32 %v1835, %v1940
        %v1950 = vsub.f32 %v1839, %v1943
        %v1951 = vsub.f32 %v1841, %v1943
        %v1952 = vmul.f32 %v1944, 1.442695
        %v1953 = vpow.pop %v1952
        %v1954 = vmul.f32 %v1945, 1.442695
        %v1955 = vpow.pop %v1954
        %v1956 = vmul.f32 %v1946, 1.442695
        %v1957 = vpow.pop %v1956
        %v1958 = vmul.f32 %v1947, 1.442695
        %v1959 = vpow.pop %v1958
        %v1960 = vmul.f32 %v1948, 1.442695
        %v1961 = vpow.pop %v1960
        %v1962 = vmul.f32 %v1949, 1.442695
        %v1963 = vpow.pop %v1962
        %v1964 = vmul.f32 %v1950, 1.442695
        %v1965 = vpow.pop %v1964
        %v1966 = vmul.f32 %v1951, 1.442695
        %v1967 = vpow.pop %v1966
        %v1968 = vadd.f32 %v1953, %v1955
        %1969 = vadd.xlane.f32.xlu0 %v1968
        %v1970 = vpop.xlane.xlu0 %1969
        %v1971 = vadd.f32 %v1957, %v1959
        %1972 = vadd.xlane.f32.xlu0 %v1971
        %v1973 = vpop.xlane.xlu0 %1972
        %v1974 = vadd.f32 %v1961, %v1963
        %1975 = vadd.xlane.f32.xlu0 %v1974
        %v1976 = vpop.xlane.xlu0 %1975
        %v1977 = vadd.f32 %v1965, %v1967
        %1978 = vadd.xlane.f32.xlu0 %v1977
        %v1979 = vpop.xlane.xlu0 %1978
        %v1980 = vrcp.pop %v1970
        %v1981 = vrcp.pop %v1973
        %v1982 = vrcp.pop %v1976
        %v1983 = vrcp.pop %v1979
        %v1984 = vmul.f32 %v1953, %v1980
        %v1985 = vmul.f32 %v1955, %v1980
        %v1986 = vmul.f32 %v1957, %v1981
        %v1987 = vmul.f32 %v1959, %v1981
        %v1988 = vmul.f32 %v1961, %v1982
        %v1989 = vmul.f32 %v1963, %v1982
        %v1990 = vmul.f32 %v1965, %v1983
        %v1991 = vmul.f32 %v1967, %v1983
        %v1992 = vmul.f32 %v1984, %v1543
        %v1993 = vmul.f32 %v1985, %v1544
        %v1994 = vmul.f32 %v1986, %v1545
        %v1995 = vmul.f32 %v1987, %v1546
        %v1996 = vmul.f32 %v1988, %v1547
        %v1997 = vmul.f32 %v1989, %v1548
        %v1998 = vmul.f32 %v1990, %v1549
        %v1999 = vmul.f32 %v1991, %v1550
        %s2000 = scalar_lea.vmem %s405, 128 [#allocation11]
        %2001 = vst [vmem:[%s2000] sm:$0xff] %v1992
        %2002 = vst [vmem:[%s2000 + $0x8] sm:$0xff] %v1993
        %2003 = vst [vmem:[%s2000 + $0x10] sm:$0xff] %v1994
        %2004 = vst [vmem:[%s2000 + $0x18] sm:$0xff] %v1995
        %2005 = vst [vmem:[%s2000 + $0x20] sm:$0xff] %v1996
        %2006 = vst [vmem:[%s2000 + $0x28] sm:$0xff] %v1997
        %2007 = vst [vmem:[%s2000 + $0x30] sm:$0xff] %v1998
        %2008 = vst [vmem:[%s2000 + $0x38] sm:$0xff] %v1999
        %v2009 = vmax.f32 %v1910, %v1912
        %2010 = vmax.xlane.f32.xlu0 %v2009
        %v2011 = vpop.xlane.xlu0 %2010
        %v2012 = vmax.f32 %v1916, %v1918
        %2013 = vmax.xlane.f32.xlu0 %v2012
        %v2014 = vpop.xlane.xlu0 %2013
        %v2015 = vmax.f32 %v1922, %v1924
        %2016 = vmax.xlane.f32.xlu0 %v2015
        %v2017 = vpop.xlane.xlu0 %2016
        %v2018 = vmax.f32 %v1928, %v1930
        %2019 = vmax.xlane.f32.xlu0 %v2018
        %v2020 = vpop.xlane.xlu0 %2019
        %v2021 = vsub.f32 %v1910, %v2011
        %v2022 = vsub.f32 %v1912, %v2011
        %v2023 = vsub.f32 %v1916, %v2014
        %v2024 = vsub.f32 %v1918, %v2014
        %v2025 = vsub.f32 %v1922, %v2017
        %v2026 = vsub.f32 %v1924, %v2017
        %v2027 = vsub.f32 %v1928, %v2020
        %v2028 = vsub.f32 %v1930, %v2020
        %v2029 = vmul.f32 %v2021, 1.442695
        %v2030 = vpow.pop %v2029
        %v2031 = vmul.f32 %v2022, 1.442695
        %v2032 = vpow.pop %v2031
        %v2033 = vmul.f32 %v2023, 1.442695
        %v2034 = vpow.pop %v2033
        %v2035 = vmul.f32 %v2024, 1.442695
        %v2036 = vpow.pop %v2035
        %v2037 = vmul.f32 %v2025, 1.442695
        %v2038 = vpow.pop %v2037
        %v2039 = vmul.f32 %v2026, 1.442695
        %v2040 = vpow.pop %v2039
        %v2041 = vmul.f32 %v2027, 1.442695
        %v2042 = vpow.pop %v2041
        %v2043 = vmul.f32 %v2028, 1.442695
        %v2044 = vpow.pop %v2043
        %v2045 = vadd.f32 %v2030, %v2032
        %2046 = vadd.xlane.f32.xlu0 %v2045
        %v2047 = vpop.xlane.xlu0 %2046
        %v2048 = vadd.f32 %v2034, %v2036
        %2049 = vadd.xlane.f32.xlu0 %v2048
        %v2050 = vpop.xlane.xlu0 %2049
        %v2051 = vadd.f32 %v2038, %v2040
        %2052 = vadd.xlane.f32.xlu0 %v2051
        %v2053 = vpop.xlane.xlu0 %2052
        %v2054 = vadd.f32 %v2042, %v2044
        %2055 = vadd.xlane.f32.xlu0 %v2054
        %v2056 = vpop.xlane.xlu0 %2055
        %v2057 = vrcp.pop %v2047
        %v2058 = vrcp.pop %v2050
        %v2059 = vrcp.pop %v2053
        %v2060 = vrcp.pop %v2056
        %v2061 = vmul.f32 %v2030, %v2057
        %v2062 = vmul.f32 %v2032, %v2057
        %v2063 = vmul.f32 %v2034, %v2058
        %v2064 = vmul.f32 %v2036, %v2058
        %v2065 = vmul.f32 %v2038, %v2059
        %v2066 = vmul.f32 %v2040, %v2059
        %v2067 = vmul.f32 %v2042, %v2060
        %v2068 = vmul.f32 %v2044, %v2060
        %v2069 = vmul.f32 %v2061, %v1552
        %v2070 = vmul.f32 %v2062, %v1553
        %v2071 = vmul.f32 %v2063, %v1554
        %v2072 = vmul.f32 %v2064, %v1555
        %v2073 = vmul.f32 %v2065, %v1556
        %v2074 = vmul.f32 %v2066, %v1557
        %v2075 = vmul.f32 %v2067, %v1558
        %v2076 = vmul.f32 %v2068, %v1559
        %s2077 = scalar_lea.vmem %s412, 128 [#allocation12]
        %2078 = vst [vmem:[%s2077] sm:$0xff] %v2069
        %2079 = vst [vmem:[%s2077 + $0x8] sm:$0xff] %v2070
        %2080 = vst [vmem:[%s2077 + $0x10] sm:$0xff] %v2071
        %2081 = vst [vmem:[%s2077 + $0x18] sm:$0xff] %v2072
        %2082 = vst [vmem:[%s2077 + $0x20] sm:$0xff] %v2073
        %2083 = vst [vmem:[%s2077 + $0x28] sm:$0xff] %v2074
        %2084 = vst [vmem:[%s2077 + $0x30] sm:$0xff] %v2075
        %2085 = vst [vmem:[%s2077 + $0x38] sm:$0xff] %v2076
        %s2086 = scalar_lea.vmem %s343, 192 [#allocation2]
        %v2087 = vld [vmem:[%s2086] sm:$0xff]
        %v2088 = vld [vmem:[%s2086 + $0x8] sm:$0xff]
        %v2089 = vld [vmem:[%s2086 + $0x10] sm:$0xff]
        %v2090 = vld [vmem:[%s2086 + $0x18] sm:$0xff]
        %v2091 = vld [vmem:[%s2086 + $0x20] sm:$0xff]
        %v2092 = vld [vmem:[%s2086 + $0x28] sm:$0xff]
        %v2093 = vld [vmem:[%s2086 + $0x30] sm:$0xff]
        %v2094 = vld [vmem:[%s2086 + $0x38] sm:$0xff]
        %s2095 = scalar_lea.vmem %s352, 192 [#allocation5]
        %v2096 = vld [vmem:[%s2095] sm:$0xff]
        %v2097 = vld [vmem:[%s2095 + $0x8] sm:$0xff]
        %v2098 = vld [vmem:[%s2095 + $0x10] sm:$0xff]
        %v2099 = vld [vmem:[%s2095 + $0x18] sm:$0xff]
        %v2100 = vld [vmem:[%s2095 + $0x20] sm:$0xff]
        %v2101 = vld [vmem:[%s2095 + $0x28] sm:$0xff]
        %v2102 = vld [vmem:[%s2095 + $0x30] sm:$0xff]
        %v2103 = vld [vmem:[%s2095 + $0x38] sm:$0xff]
        %2104 = vmatprep.subr.mxu0 %v2088
        %2105 = vmatpush1.msra.mxu0 %v2087
        %2106 = vmatprep.subr.mxu0 %v2090
        %2107 = vmatpush1.msra.mxu0 %v2089
        %2108 = vmatprep.subr.mxu0 %v2092
        %2109 = vmatpush1.msra.mxu0 %v2091
        %2110 = vmatprep.subr.mxu0 %v2094
        %2111 = vmatpush1.msra.mxu0 %v2093
        %2112 = vmatprep.subr.mxu0 0.0
        %2113 = vmatpush1.msra.mxu0 0.0
        %2114 = vmatprep.subr.mxu0 0.0
        %2115 = vmatpush1.msra.mxu0 0.0
        %2116 = vmatprep.subr.mxu0 0.0
        %2117 = vmatpush1.msra.mxu0 0.0
        %2118 = vmatprep.subr.mxu0 0.0
        %2119 = vmatpush1.msra.mxu0 0.0
        %2120 = vmatprep.subr.mxu0 0.0
        %2121 = vmatpush1.msra.mxu0 0.0
        %2122 = vmatprep.subr.mxu0 0.0
        %2123 = vmatpush1.msra.mxu0 0.0
        %2124 = vmatprep.subr.mxu0 0.0
        %2125 = vmatpush1.msra.mxu0 0.0
        %2126 = vmatprep.subr.mxu0 0.0
        %2127 = vmatpush1.msra.mxu0 0.0
        %2128 = vmatprep.subr.mxu0 0.0
        %2129 = vmatpush1.msra.mxu0 0.0
        %2130 = vmatprep.subr.mxu0 0.0
        %2131 = vmatpush1.msra.mxu0 0.0
        %2132 = vmatprep.subr.mxu0 0.0
        %2133 = vmatpush1.msra.mxu0 0.0
        %2134 = vmatprep.subr.mxu0 0.0
        %2135 = vmatpush1.msra.mxu0 0.0
        %2136 = vmatprep.subr.mxu0 0.0
        %2137 = vmatpush1.msra.mxu0 0.0
        %2138 = vmatprep.subr.mxu0 0.0
        %2139 = vmatpush1.msra.mxu0 0.0
        %2140 = vmatprep.subr.mxu0 0.0
        %2141 = vmatpush1.msra.mxu0 0.0
        %2142 = vmatprep.subr.mxu0 0.0
        %2143 = vmatpush1.msra.mxu0 0.0
        %2144 = vmatprep.subr.mxu0 0.0
        %2145 = vmatpush1.msra.mxu0 0.0
        %2146 = vmatprep.subr.mxu0 0.0
        %2147 = vmatpush1.msra.mxu0 0.0
        %2148 = vmatprep.subr.mxu0 0.0
        %2149 = vmatpush1.msra.mxu0 0.0
        %2150 = vmatprep.subr.mxu0 0.0
        %2151 = vmatpush1.msra.mxu0 0.0
        %2152 = vmatprep.subr.mxu0 0.0
        %2153 = vmatpush1.msra.mxu0 0.0
        %2154 = vmatprep.subr.mxu0 0.0
        %2155 = vmatpush1.msra.mxu0 0.0
        %2156 = vmatprep.subr.mxu0 0.0
        %2157 = vmatpush1.msra.mxu0 0.0
        %2158 = vmatprep.subr.mxu0 0.0
        %2159 = vmatpush1.msra.mxu0 0.0
        %2160 = vmatprep.subr.mxu0 0.0
        %2161 = vmatpush1.msra.mxu0 0.0
        %2162 = vmatprep.subr.mxu0 0.0
        %2163 = vmatpush1.msra.mxu0 0.0
        %2164 = vmatprep.subr.mxu0 0.0
        %2165 = vmatpush1.msra.mxu0 0.0
        %2166 = vmatprep.subr.mxu0 0.0
        %2167 = vmatpush1.msra.mxu0 0.0
        %2168 = vmatprep.mubr.f32.mxu0 0.0
        %2169 = vmatmul.mubr.f32.gmra.mrb[0].mxu0 %v451
        %v2170 = vpop.f32.mrb[0].mxu0
        %v2171 = vadd.f32 %v425, %v2170
        %v2172 = vpop.f32.mrb[0].mxu0
        %v2173 = vadd.f32 %v426, %v2172
        %2174 = vmatprep.mubr.f32.mxu0 0.0
        %2175 = vmatmul.mubr.f32.gmra.mrb[0].mxu0 %v454
        %v2176 = vpop.f32.mrb[0].mxu0
        %v2177 = vadd.f32 %v427, %v2176
        %v2178 = vpop.f32.mrb[0].mxu0
        %v2179 = vadd.f32 %v428, %v2178
        %2180 = vmatprep.mubr.f32.mxu0 0.0
        %2181 = vmatmul.mubr.f32.gmra.mrb[0].mxu0 %v457
        %v2182 = vpop.f32.mrb[0].mxu0
        %v2183 = vadd.f32 %v429, %v2182
        %v2184 = vpop.f32.mrb[0].mxu0
        %v2185 = vadd.f32 %v430, %v2184
        %2186 = vmatprep.mubr.f32.mxu0 0.0
        %2187 = vmatmul.mubr.f32.gmra.mrb[0].mxu0 %v460
        %v2188 = vpop.f32.mrb[0].mxu0
        %v2189 = vadd.f32 %v431, %v2188
        %v2190 = vpop.f32.mrb[0].mxu0
        %v2191 = vadd.f32 %v432, %v2190
        %2192 = vdwg.mxu0
        %2193 = vmatprep.subr.mxu0 %v2097
        %2194 = vmatpush1.msra.mxu0 %v2096
        %2195 = vmatprep.subr.mxu0 %v2099
        %2196 = vmatpush1.msra.mxu0 %v2098
        %2197 = vmatprep.subr.mxu0 %v2101
        %2198 = vmatpush1.msra.mxu0 %v2100
        %2199 = vmatprep.subr.mxu0 %v2103
        %2200 = vmatpush1.msra.mxu0 %v2102
        %2201 = vmatprep.subr.mxu0 0.0
        %2202 = vmatpush1.msra.mxu0 0.0
        %2203 = vmatprep.subr.mxu0 0.0
        %2204 = vmatpush1.msra.mxu0 0.0
        %2205 = vmatprep.subr.mxu0 0.0
        %2206 = vmatpush1.msra.mxu0 0.0
        %2207 = vmatprep.subr.mxu0 0.0
        %2208 = vmatpush1.msra.mxu0 0.0
        %2209 = vmatprep.subr.mxu0 0.0
        %2210 = vmatpush1.msra.mxu0 0.0
        %2211 = vmatprep.subr.mxu0 0.0
        %2212 = vmatpush1.msra.mxu0 0.0
        %2213 = vmatprep.subr.mxu0 0.0
        %2214 = vmatpush1.msra.mxu0 0.0
        %2215 = vmatprep.subr.mxu0 0.0
        %2216 = vmatpush1.msra.mxu0 0.0
        %2217 = vmatprep.subr.mxu0 0.0
        %2218 = vmatpush1.msra.mxu0 0.0
        %2219 = vmatprep.subr.mxu0 0.0
        %2220 = vmatpush1.msra.mxu0 0.0
        %2221 = vmatprep.subr.mxu0 0.0
        %2222 = vmatpush1.msra.mxu0 0.0
        %2223 = vmatprep.subr.mxu0 0.0
        %2224 = vmatpush1.msra.mxu0 0.0
        %2225 = vmatprep.subr.mxu0 0.0
        %2226 = vmatpush1.msra.mxu0 0.0
        %2227 = vmatprep.subr.mxu0 0.0
        %2228 = vmatpush1.msra.mxu0 0.0
        %2229 = vmatprep.subr.mxu0 0.0
        %2230 = vmatpush1.msra.mxu0 0.0
        %2231 = vmatprep.subr.mxu0 0.0
        %2232 = vmatpush1.msra.mxu0 0.0
        %2233 = vmatprep.subr.mxu0 0.0
        %2234 = vmatpush1.msra.mxu0 0.0
        %2235 = vmatprep.subr.mxu0 0.0
        %2236 = vmatpush1.msra.mxu0 0.0
        %2237 = vmatprep.subr.mxu0 0.0
        %2238 = vmatpush1.msra.mxu0 0.0
        %2239 = vmatprep.subr.mxu0 0.0
        %2240 = vmatpush1.msra.mxu0 0.0
        %2241 = vmatprep.subr.mxu0 0.0
        %2242 = vmatpush1.msra.mxu0 0.0
        %2243 = vmatprep.subr.mxu0 0.0
        %2244 = vmatpush1.msra.mxu0 0.0
        %2245 = vmatprep.subr.mxu0 0.0
        %2246 = vmatpush1.msra.mxu0 0.0
        %2247 = vmatprep.subr.mxu0 0.0
        %2248 = vmatpush1.msra.mxu0 0.0
        %2249 = vmatprep.subr.mxu0 0.0
        %2250 = vmatpush1.msra.mxu0 0.0
        %2251 = vmatprep.subr.mxu0 0.0
        %2252 = vmatpush1.msra.mxu0 0.0
        %2253 = vmatprep.subr.mxu0 0.0
        %2254 = vmatpush1.msra.mxu0 0.0
        %2255 = vmatprep.subr.mxu0 0.0
        %2256 = vmatpush1.msra.mxu0 0.0
        %2257 = vmatprep.mubr.f32.mxu0 0.0
        %2258 = vmatmul.mubr.f32.gmra.mrb[0].mxu0 %v451
        %v2259 = vpop.f32.mrb[0].mxu0
        %v2260 = vadd.f32 %v425, %v2259
        %v2261 = vpop.f32.mrb[0].mxu0
        %v2262 = vadd.f32 %v426, %v2261
        %2263 = vmatprep.mubr.f32.mxu0 0.0
        %2264 = vmatmul.mubr.f32.gmra.mrb[0].mxu0 %v454
        %v2265 = vpop.f32.mrb[0].mxu0
        %v2266 = vadd.f32 %v427, %v2265
        %v2267 = vpop.f32.mrb[0].mxu0
        %v2268 = vadd.f32 %v428, %v2267
        %2269 = vmatprep.mubr.f32.mxu0 0.0
        %2270 = vmatmul.mubr.f32.gmra.mrb[0].mxu0 %v457
        %v2271 = vpop.f32.mrb[0].mxu0
        %v2272 = vadd.f32 %v429, %v2271
        %v2273 = vpop.f32.mrb[0].mxu0
        %v2274 = vadd.f32 %v430, %v2273
        %2275 = vmatprep.mubr.f32.mxu0 0.0
        %2276 = vmatmul.mubr.f32.gmra.mrb[0].mxu0 %v460
        %v2277 = vpop.f32.mrb[0].mxu0
        %v2278 = vadd.f32 %v431, %v2277
        %v2279 = vpop.f32.mrb[0].mxu0
        %v2280 = vadd.f32 %v432, %v2279
        %2281 = vdwg.mxu0
        %v2282 = vtanh.pop %v2171
        %v2283 = vtanh.pop %v2173
        %v2284 = vtanh.pop %v2260
        %v2285 = vtanh.pop %v2262
        %v2286 = vtanh.pop %v2177
        %v2287 = vtanh.pop %v2179
        %v2288 = vtanh.pop %v2266
        %v2289 = vtanh.pop %v2268
        %v2290 = vtanh.pop %v2183
        %v2291 = vtanh.pop %v2185
        %v2292 = vtanh.pop %v2272
        %v2293 = vtanh.pop %v2274
        %v2294 = vtanh.pop %v2189
        %v2295 = vtanh.pop %v2191
        %v2296 = vtanh.pop %v2278
        %v2297 = vtanh.pop %v2280
        %2298 = vmatprep.subr.mxu0 %v2283
        %2299 = vmatpush1.msra.mxu0 %v2282
        %2300 = vmatprep.subr.mxu0 %v2287
        %2301 = vmatpush1.msra.mxu0 %v2286
        %2302 = vmatprep.subr.mxu0 %v2291
        %2303 = vmatpush1.msra.mxu0 %v2290
        %2304 = vmatprep.subr.mxu0 %v2295
        %2305 = vmatpush1.msra.mxu0 %v2294
        %2306 = vmatprep.subr.mxu0 0.0
        %2307 = vmatpush1.msra.mxu0 0.0
        %2308 = vmatprep.subr.mxu0 0.0
        %2309 = vmatpush1.msra.mxu0 0.0
        %2310 = vmatprep.subr.mxu0 0.0
        %2311 = vmatpush1.msra.mxu0 0.0
        %2312 = vmatprep.subr.mxu0 0.0
        %2313 = vmatpush1.msra.mxu0 0.0
        %2314 = vmatprep.subr.mxu0 0.0
        %2315 = vmatpush1.msra.mxu0 0.0
        %2316 = vmatprep.subr.mxu0 0.0
        %2317 = vmatpush1.msra.mxu0 0.0
        %2318 = vmatprep.subr.mxu0 0.0
        %2319 = vmatpush1.msra.mxu0 0.0
        %2320 = vmatprep.subr.mxu0 0.0
        %2321 = vmatpush1.msra.mxu0 0.0
        %2322 = vmatprep.subr.mxu0 0.0
        %2323 = vmatpush1.msra.mxu0 0.0
        %2324 = vmatprep.subr.mxu0 0.0
        %2325 = vmatpush1.msra.mxu0 0.0
        %2326 = vmatprep.subr.mxu0 0.0
        %2327 = vmatpush1.msra.mxu0 0.0
        %2328 = vmatprep.subr.mxu0 0.0
        %2329 = vmatpush1.msra.mxu0 0.0
        %2330 = vmatprep.subr.mxu0 0.0
        %2331 = vmatpush1.msra.mxu0 0.0
        %2332 = vmatprep.subr.mxu0 0.0
        %2333 = vmatpush1.msra.mxu0 0.0
        %2334 = vmatprep.subr.mxu0 0.0
        %2335 = vmatpush1.msra.mxu0 0.0
        %2336 = vmatprep.subr.mxu0 0.0
        %2337 = vmatpush1.msra.mxu0 0.0
        %2338 = vmatprep.subr.mxu0 0.0
        %2339 = vmatpush1.msra.mxu0 0.0
        %2340 = vmatprep.subr.mxu0 0.0
        %2341 = vmatpush1.msra.mxu0 0.0
        %2342 = vmatprep.subr.mxu0 0.0
        %2343 = vmatpush1.msra.mxu0 0.0
        %2344 = vmatprep.subr.mxu0 0.0
        %2345 = vmatpush1.msra.mxu0 0.0
        %2346 = vmatprep.subr.mxu0 0.0
        %2347 = vmatpush1.msra.mxu0 0.0
        %2348 = vmatprep.subr.mxu0 0.0
        %2349 = vmatpush1.msra.mxu0 0.0
        %2350 = vmatprep.subr.mxu0 0.0
        %2351 = vmatpush1.msra.mxu0 0.0
        %2352 = vmatprep.subr.mxu0 0.0
        %2353 = vmatpush1.msra.mxu0 0.0
        %2354 = vmatprep.subr.mxu0 0.0
        %2355 = vmatpush1.msra.mxu0 0.0
        %2356 = vmatprep.subr.mxu0 0.0
        %2357 = vmatpush1.msra.mxu0 0.0
        %2358 = vmatprep.subr.mxu0 0.0
        %2359 = vmatpush1.msra.mxu0 0.0
        %2360 = vmatprep.subr.mxu0 0.0
        %2361 = vmatpush1.msra.mxu0 0.0
        %2362 = vmatprep.mubr.f32.mxu0 0.0
        %2363 = vmatmul.mubr.f32.gmra.mrb[0].mxu0 %v657
        %v2364 = vpop.f32.mrb[0].mxu0
        %v2365 = vadd.f32 0.0, %v2364
        %v2366 = vpop.f32.mrb[0].mxu0
        %v2367 = vadd.f32 0.0, %v2366
        %2368 = vmatprep.mubr.f32.mxu0 0.0
        %2369 = vmatmul.mubr.f32.gmra.mrb[0].mxu0 %v660
        %v2370 = vpop.f32.mrb[0].mxu0
        %v2371 = vadd.f32 0.0, %v2370
        %v2372 = vpop.f32.mrb[0].mxu0
        %v2373 = vadd.f32 0.0, %v2372
        %2374 = vmatprep.mubr.f32.mxu0 0.0
        %2375 = vmatmul.mubr.f32.gmra.mrb[0].mxu0 %v663
        %v2376 = vpop.f32.mrb[0].mxu0
        %v2377 = vadd.f32 0.0, %v2376
        %v2378 = vpop.f32.mrb[0].mxu0
        %v2379 = vadd.f32 0.0, %v2378
        %2380 = vmatprep.mubr.f32.mxu0 0.0
        %2381 = vmatmul.mubr.f32.gmra.mrb[0].mxu0 %v666
        %v2382 = vpop.f32.mrb[0].mxu0
        %v2383 = vadd.f32 0.0, %v2382
        %v2384 = vpop.f32.mrb[0].mxu0
        %v2385 = vadd.f32 0.0, %v2384
        %2386 = vdwg.mxu0
        %2387 = vmatprep.subr.mxu0 %v2285
        %2388 = vmatpush1.msra.mxu0 %v2284
        %2389 = vmatprep.subr.mxu0 %v2289
        %2390 = vmatpush1.msra.mxu0 %v2288
        %2391 = vmatprep.subr.mxu0 %v2293
        %2392 = vmatpush1.msra.mxu0 %v2292
        %2393 = vmatprep.subr.mxu0 %v2297
        %2394 = vmatpush1.msra.mxu0 %v2296
        %2395 = vmatprep.subr.mxu0 0.0
        %2396 = vmatpush1.msra.mxu0 0.0
        %2397 = vmatprep.subr.mxu0 0.0
        %2398 = vmatpush1.msra.mxu0 0.0
        %2399 = vmatprep.subr.mxu0 0.0
        %2400 = vmatpush1.msra.mxu0 0.0
        %2401 = vmatprep.subr.mxu0 0.0
        %2402 = vmatpush1.msra.mxu0 0.0
        %2403 = vmatprep.subr.mxu0 0.0
        %2404 = vmatpush1.msra.mxu0 0.0
        %2405 = vmatprep.subr.mxu0 0.0
        %2406 = vmatpush1.msra.mxu0 0.0
        %2407 = vmatprep.subr.mxu0 0.0
        %2408 = vmatpush1.msra.mxu0 0.0
        %2409 = vmatprep.subr.mxu0 0.0
        %2410 = vmatpush1.msra.mxu0 0.0
        %2411 = vmatprep.subr.mxu0 0.0
        %2412 = vmatpush1.msra.mxu0 0.0
        %2413 = vmatprep.subr.mxu0 0.0
        %2414 = vmatpush1.msra.mxu0 0.0
        %2415 = vmatprep.subr.mxu0 0.0
        %2416 = vmatpush1.msra.mxu0 0.0
        %2417 = vmatprep.subr.mxu0 0.0
        %2418 = vmatpush1.msra.mxu0 0.0
        %2419 = vmatprep.subr.mxu0 0.0
        %2420 = vmatpush1.msra.mxu0 0.0
        %2421 = vmatprep.subr.mxu0 0.0
        %2422 = vmatpush1.msra.mxu0 0.0
        %2423 = vmatprep.subr.mxu0 0.0
        %2424 = vmatpush1.msra.mxu0 0.0
        %2425 = vmatprep.subr.mxu0 0.0
        %2426 = vmatpush1.msra.mxu0 0.0
        %2427 = vmatprep.subr.mxu0 0.0
        %2428 = vmatpush1.msra.mxu0 0.0
        %2429 = vmatprep.subr.mxu0 0.0
        %2430 = vmatpush1.msra.mxu0 0.0
        %2431 = vmatprep.subr.mxu0 0.0
        %2432 = vmatpush1.msra.mxu0 0.0
        %2433 = vmatprep.subr.mxu0 0.0
        %2434 = vmatpush1.msra.mxu0 0.0
        %2435 = vmatprep.subr.mxu0 0.0
        %2436 = vmatpush1.msra.mxu0 0.0
        %2437 = vmatprep.subr.mxu0 0.0
        %2438 = vmatpush1.msra.mxu0 0.0
        %2439 = vmatprep.subr.mxu0 0.0
        %2440 = vmatpush1.msra.mxu0 0.0
        %2441 = vmatprep.subr.mxu0 0.0
        %2442 = vmatpush1.msra.mxu0 0.0
        %2443 = vmatprep.subr.mxu0 0.0
        %2444 = vmatpush1.msra.mxu0 0.0
        %2445 = vmatprep.subr.mxu0 0.0
        %2446 = vmatpush1.msra.mxu0 0.0
        %2447 = vmatprep.subr.mxu0 0.0
        %2448 = vmatpush1.msra.mxu0 0.0
        %2449 = vmatprep.subr.mxu0 0.0
        %2450 = vmatpush1.msra.mxu0 0.0
        %2451 = vmatprep.mubr.f32.mxu0 0.0
        %2452 = vmatmul.mubr.f32.gmra.mrb[0].mxu0 %v657
        %v2453 = vpop.f32.mrb[0].mxu0
        %v2454 = vadd.f32 0.0, %v2453
        %v2455 = vpop.f32.mrb[0].mxu0
        %v2456 = vadd.f32 0.0, %v2455
        %2457 = vmatprep.mubr.f32.mxu0 0.0
        %2458 = vmatmul.mubr.f32.gmra.mrb[0].mxu0 %v660
        %v2459 = vpop.f32.mrb[0].mxu0
        %v2460 = vadd.f32 0.0, %v2459
        %v2461 = vpop.f32.mrb[0].mxu0
        %v2462 = vadd.f32 0.0, %v2461
        %2463 = vmatprep.mubr.f32.mxu0 0.0
        %2464 = vmatmul.mubr.f32.gmra.mrb[0].mxu0 %v663
        %v2465 = vpop.f32.mrb[0].mxu0
        %v2466 = vadd.f32 0.0, %v2465
        %v2467 = vpop.f32.mrb[0].mxu0
        %v2468 = vadd.f32 0.0, %v2467
        %2469 = vmatprep.mubr.f32.mxu0 0.0
        %2470 = vmatmul.mubr.f32.gmra.mrb[0].mxu0 %v666
        %v2471 = vpop.f32.mrb[0].mxu0
        %v2472 = vadd.f32 0.0, %v2471
        %v2473 = vpop.f32.mrb[0].mxu0
        %v2474 = vadd.f32 0.0, %v2473
        %2475 = vdwg.mxu0
        %v2476 = vmax.f32 %v2365, %v2367
        %2477 = vmax.xlane.f32.xlu0 %v2476
        %v2478 = vpop.xlane.xlu0 %2477
        %v2479 = vmax.f32 %v2371, %v2373
        %2480 = vmax.xlane.f32.xlu0 %v2479
        %v2481 = vpop.xlane.xlu0 %2480
        %v2482 = vmax.f32 %v2377, %v2379
        %2483 = vmax.xlane.f32.xlu0 %v2482
        %v2484 = vpop.xlane.xlu0 %2483
        %v2485 = vmax.f32 %v2383, %v2385
        %2486 = vmax.xlane.f32.xlu0 %v2485
        %v2487 = vpop.xlane.xlu0 %2486
        %v2488 = vsub.f32 %v2365, %v2478
        %v2489 = vsub.f32 %v2367, %v2478
        %v2490 = vsub.f32 %v2371, %v2481
        %v2491 = vsub.f32 %v2373, %v2481
        %v2492 = vsub.f32 %v2377, %v2484
        %v2493 = vsub.f32 %v2379, %v2484
        %v2494 = vsub.f32 %v2383, %v2487
        %v2495 = vsub.f32 %v2385, %v2487
        %v2496 = vmul.f32 %v2488, 1.442695
        %v2497 = vpow.pop %v2496
        %v2498 = vmul.f32 %v2489, 1.442695
        %v2499 = vpow.pop %v2498
        %v2500 = vmul.f32 %v2490, 1.442695
        %v2501 = vpow.pop %v2500
        %v2502 = vmul.f32 %v2491, 1.442695
        %v2503 = vpow.pop %v2502
        %v2504 = vmul.f32 %v2492, 1.442695
        %v2505 = vpow.pop %v2504
        %v2506 = vmul.f32 %v2493, 1.442695
        %v2507 = vpow.pop %v2506
        %v2508 = vmul.f32 %v2494, 1.442695
        %v2509 = vpow.pop %v2508
        %v2510 = vmul.f32 %v2495, 1.442695
        %v2511 = vpow.pop %v2510
        %v2512 = vadd.f32 %v2497, %v2499
        %2513 = vadd.xlane.f32.xlu0 %v2512
        %v2514 = vpop.xlane.xlu0 %2513
        %v2515 = vadd.f32 %v2501, %v2503
        %2516 = vadd.xlane.f32.xlu0 %v2515
        %v2517 = vpop.xlane.xlu0 %2516
        %v2518 = vadd.f32 %v2505, %v2507
        %2519 = vadd.xlane.f32.xlu0 %v2518
        %v2520 = vpop.xlane.xlu0 %2519
        %v2521 = vadd.f32 %v2509, %v2511
        %2522 = vadd.xlane.f32.xlu0 %v2521
        %v2523 = vpop.xlane.xlu0 %2522
        %v2524 = vrcp.pop %v2514
        %v2525 = vrcp.pop %v2517
        %v2526 = vrcp.pop %v2520
        %v2527 = vrcp.pop %v2523
        %v2528 = vmul.f32 %v2497, %v2524
        %v2529 = vmul.f32 %v2499, %v2524
        %v2530 = vmul.f32 %v2501, %v2525
        %v2531 = vmul.f32 %v2503, %v2525
        %v2532 = vmul.f32 %v2505, %v2526
        %v2533 = vmul.f32 %v2507, %v2526
        %v2534 = vmul.f32 %v2509, %v2527
        %v2535 = vmul.f32 %v2511, %v2527
        %v2536 = vmul.f32 %v2528, %v2087
        %v2537 = vmul.f32 %v2529, %v2088
        %v2538 = vmul.f32 %v2530, %v2089
        %v2539 = vmul.f32 %v2531, %v2090
        %v2540 = vmul.f32 %v2532, %v2091
        %v2541 = vmul.f32 %v2533, %v2092
        %v2542 = vmul.f32 %v2534, %v2093
        %v2543 = vmul.f32 %v2535, %v2094
        %s2544 = scalar_lea.vmem %s405, 192 [#allocation11]
        %2545 = vst [vmem:[%s2544] sm:$0xff] %v2536
        %2546 = vst [vmem:[%s2544 + $0x8] sm:$0xff] %v2537
        %2547 = vst [vmem:[%s2544 + $0x10] sm:$0xff] %v2538
        %2548 = vst [vmem:[%s2544 + $0x18] sm:$0xff] %v2539
        %2549 = vst [vmem:[%s2544 + $0x20] sm:$0xff] %v2540
        %2550 = vst [vmem:[%s2544 + $0x28] sm:$0xff] %v2541
        %2551 = vst [vmem:[%s2544 + $0x30] sm:$0xff] %v2542
        %2552 = vst [vmem:[%s2544 + $0x38] sm:$0xff] %v2543
        %v2553 = vmax.f32 %v2454, %v2456
        %2554 = vmax.xlane.f32.xlu0 %v2553
        %v2555 = vpop.xlane.xlu0 %2554
        %v2556 = vmax.f32 %v2460, %v2462
        %2557 = vmax.xlane.f32.xlu0 %v2556
        %v2558 = vpop.xlane.xlu0 %2557
        %v2559 = vmax.f32 %v2466, %v2468
        %2560 = vmax.xlane.f32.xlu0 %v2559
        %v2561 = vpop.xlane.xlu0 %2560
        %v2562 = vmax.f32 %v2472, %v2474
        %2563 = vmax.xlane.f32.xlu0 %v2562
        %v2564 = vpop.xlane.xlu0 %2563
        %v2565 = vsub.f32 %v2454, %v2555
        %v2566 = vsub.f32 %v2456, %v2555
        %v2567 = vsub.f32 %v2460, %v2558
        %v2568 = vsub.f32 %v2462, %v2558
        %v2569 = vsub.f32 %v2466, %v2561
        %v2570 = vsub.f32 %v2468, %v2561
        %v2571 = vsub.f32 %v2472, %v2564
        %v2572 = vsub.f32 %v2474, %v2564
        %v2573 = vmul.f32 %v2565, 1.442695
        %v2574 = vpow.pop %v2573
        %v2575 = vmul.f32 %v2566, 1.442695
        %v2576 = vpow.pop %v2575
        %v2577 = vmul.f32 %v2567, 1.442695
        %v2578 = vpow.pop %v2577
        %v2579 = vmul.f32 %v2568, 1.442695
        %v2580 = vpow.pop %v2579
        %v2581 = vmul.f32 %v2569, 1.442695
        %v2582 = vpow.pop %v2581
        %v2583 = vmul.f32 %v2570, 1.442695
        %v2584 = vpow.pop %v2583
        %v2585 = vmul.f32 %v2571, 1.442695
        %v2586 = vpow.pop %v2585
        %v2587 = vmul.f32 %v2572, 1.442695
        %v2588 = vpow.pop %v2587
        %v2589 = vadd.f32 %v2574, %v2576
        %2590 = vadd.xlane.f32.xlu0 %v2589
        %v2591 = vpop.xlane.xlu0 %2590
        %v2592 = vadd.f32 %v2578, %v2580
        %2593 = vadd.xlane.f32.xlu0 %v2592
        %v2594 = vpop.xlane.xlu0 %2593
        %v2595 = vadd.f32 %v2582, %v2584
        %2596 = vadd.xlane.f32.xlu0 %v2595
        %v2597 = vpop.xlane.xlu0 %2596
        %v2598 = vadd.f32 %v2586, %v2588
        %2599 = vadd.xlane.f32.xlu0 %v2598
        %v2600 = vpop.xlane.xlu0 %2599
        %v2601 = vrcp.pop %v2591
        %v2602 = vrcp.pop %v2594
        %v2603 = vrcp.pop %v2597
        %v2604 = vrcp.pop %v2600
        %v2605 = vmul.f32 %v2574, %v2601
        %v2606 = vmul.f32 %v2576, %v2601
        %v2607 = vmul.f32 %v2578, %v2602
        %v2608 = vmul.f32 %v2580, %v2602
        %v2609 = vmul.f32 %v2582, %v2603
        %v2610 = vmul.f32 %v2584, %v2603
        %v2611 = vmul.f32 %v2586, %v2604
        %v2612 = vmul.f32 %v2588, %v2604
        %v2613 = vmul.f32 %v2605, %v2096
        %v2614 = vmul.f32 %v2606, %v2097
        %v2615 = vmul.f32 %v2607, %v2098
        %v2616 = vmul.f32 %v2608, %v2099
        %v2617 = vmul.f32 %v2609, %v2100
        %v2618 = vmul.f32 %v2610, %v2101
        %v2619 = vmul.f32 %v2611, %v2102
        %v2620 = vmul.f32 %v2612, %v2103
        %s2621 = scalar_lea.vmem %s412, 192 [#allocation12]
        %2622 = vst [vmem:[%s2621] sm:$0xff] %v2613
        %2623 = vst [vmem:[%s2621 + $0x8] sm:$0xff] %v2614
        %2624 = vst [vmem:[%s2621 + $0x10] sm:$0xff] %v2615
        %2625 = vst [vmem:[%s2621 + $0x18] sm:$0xff] %v2616
        %2626 = vst [vmem:[%s2621 + $0x20] sm:$0xff] %v2617
        %2627 = vst [vmem:[%s2621 + $0x28] sm:$0xff] %v2618
        %2628 = vst [vmem:[%s2621 + $0x30] sm:$0xff] %v2619
        %2629 = vst [vmem:[%s2621 + $0x38] sm:$0xff] %v2620
        %s2630 = sand.u32 %s177, 1
        %s2631 = scalar_lea.sflag [#allocation4], %s2630
        %s2632 = sand.u32 %s177, 1
        %s2633 = smul.addr %s2632, 256
        %s2634 = scalar_lea.vmem [#allocation11], %s2633
        %s2635 = sand.u32 %s205, 1
        %s2636 = scalar_lea.sflag [#allocation13], %s2635
        %s2637 = sand.u32 %s205, 1
        %s2638 = smul.addr %s2637, 256
        %s2639 = scalar_lea.vmem [#allocation12], %s2638
        // Predicated region
        $region61: #{tpu_custom_call.1} parent=39 // pred_check
          %p2640 = pneg %p187
        $region62: #{tpu_custom_call.1} parent=39 // pred_check_branch
          %2642 = sbr.rel (%p2640) target = $region64
        $region63: #{tpu_custom_call.1} parent=39 // pred_region
          %s2643 = smul.u32 4, %s36
          %s2645 = ssub.s32 4096, 4096
          %2646 = vsyncadd %s2631, %s2645
          %s2647 = smul.addr %s2643, 8
          %s2648 = smul.addr %s35, 64
          %s2649 = sadd.s32 %s2647, %s2648
          %s2650 = smul.addr %s2649, 128
          %s2651 = scalar_lea.hbm %s5, %s2650
          %s2652 = sshll.u32 %s2634, 4
          %s2653 = int_to_ptr.vmem [resolvable:$true] %s2652
          %2658 = dma.vmem_to_hbm [thread:$0]  %s2653, 4096, %s2651, %s2631, 256, 256, 16
        $region64: #{tpu_custom_call.1} parent=39 // pred_fallthru
          _
        // Predicated region
        $region65: #{tpu_custom_call.1} parent=39 // pred_check
          %p2659 = pneg %p215
        $region66: #{tpu_custom_call.1} parent=39 // pred_check_branch
          %2661 = sbr.rel (%p2659) target = $region68
        $region67: #{tpu_custom_call.1} parent=39 // pred_region
          %s2662 = smul.u32 4, %s36
          %s2664 = ssub.s32 4096, 4096
          %2665 = vsyncadd %s2636, %s2664
          %s2666 = smul.addr %s2662, 8
          %s2667 = smul.addr %s35, 64
          %s2668 = sadd.s32 %s2666, %s2667
          %s2669 = smul.addr %s2668, 128
          %s2670 = scalar_lea.hbm %s6, %s2669
          %s2671 = sshll.u32 %s2639, 4
          %s2672 = int_to_ptr.vmem [resolvable:$true] %s2671
          %2677 = dma.vmem_to_hbm [thread:$0]  %s2672, 4096, %s2670, %s2636, 256, 256, 16
        $region68: #{tpu_custom_call.1} parent=39 // pred_fallthru
          _
      $region40: #{tpu_custom_call.1} parent=5 // pred_fallthru
        _
      %p2678 = scmp.le.s32.totalorder 2, %s26
      // Predicated region
      $region69: #{tpu_custom_call.1} parent=5 // pred_check
        %p2679 = pneg %p2678
      $region70: #{tpu_custom_call.1} parent=5 // pred_check_branch
        %2681 = sbr.rel (%p2679) target = $region72
      $region71: #{tpu_custom_call.1} parent=5 // pred_region
        %s2682 = ssub.s32 %s26, 2
        // Predicated region
        $region73: #{tpu_custom_call.1} parent=71 // pred_check
          %p2683 = pneg %p193
        $region74: #{tpu_custom_call.1} parent=71 // pred_check_branch
          %2685 = sbr.rel (%p2683) target = $region76
        $region75: #{tpu_custom_call.1} parent=71 // pred_region
          %s2686 = sand.u32 %s178, 1
          %s2687 = scalar_lea.sflag [#allocation4], %s2686
          %s2688 = sand.u32 %s178, 1
          %s2689 = smul.addr %s2688, 256
          %s2690 = scalar_lea.vmem [#allocation11], %s2689
          %2691 = dma.done %s2687, 4096
        $region76: #{tpu_custom_call.1} parent=71 // pred_fallthru
          _
        // Predicated region
        $region77: #{tpu_custom_call.1} parent=71 // pred_check
          %p2692 = pneg %p221
        $region78: #{tpu_custom_call.1} parent=71 // pred_check_branch
          %2694 = sbr.rel (%p2692) target = $region80
        $region79: #{tpu_custom_call.1} parent=71 // pred_region
          %s2695 = sand.u32 %s206, 1
          %s2696 = scalar_lea.sflag [#allocation13], %s2695
          %s2697 = sand.u32 %s206, 1
          %s2698 = smul.addr %s2697, 256
          %s2699 = scalar_lea.vmem [#allocation12], %s2698
          %2700 = dma.done %s2696, 4096
        $region80: #{tpu_custom_call.1} parent=71 // pred_fallthru
          _
      $region72: #{tpu_custom_call.1} parent=5 // pred_fallthru
        _
    $region6: #{tpu_custom_call.1} parent=1 // loop_footer
      %s30 = sadd.s32 1, %s26
    $region7: #{tpu_custom_call.1} parent=1 // loop_footer_branch
      %25 = sbr.rel target = $region3
    $region8: #{tpu_custom_call.1} parent=1 // loop_exit
      _
    %2701 = vsyncpa [#allocation3], 1
    %s2702 = scalar_lea.sflag [#allocation3], 1
    %2703 = vsyncpa %s2702, 1
    %2704 = vsyncpa [#allocation6], 1
    %s2705 = scalar_lea.sflag [#allocation6], 1
    %2706 = vsyncpa %s2705, 1
    %2707 = vsyncpa [#allocation9], 1
    %2708 = vsyncpa [#allocation4], 1
    %s2709 = scalar_lea.sflag [#allocation4], 1
    %2710 = vsyncpa %s2709, 1
    %2711 = vsyncpa [#allocation13], 1
    %s2712 = scalar_lea.sflag [#allocation13], 1
    %2713 = vsyncpa %s2712, 1

</llo_original>
